<compile_context>
chip_gen: v7x
topology: tpu7x:2x2x1
jax: 0.10.0
libtpu: 0.0.40
codegen_flags: <defaults>
</compile_context>

<pallas_src>
import functools
import math

import jax
import jax.numpy as jnp
from jax import lax
from jax.experimental import pallas as pl
from jax.experimental.pallas import tpu as pltpu

_PI = 3.14159  # matches the reference's pi_pi constant
_C0 = _PI * (1.0 / math.sqrt(4.0 * _PI))
_C1 = 2.0 * _PI / 3.0 * math.sqrt(3.0 / (4.0 * _PI))
_C4 = _PI / 4.0 * 0.5 * math.sqrt(5.0 / (4.0 * _PI))
_C5 = _PI / 4.0 * 3.0 * math.sqrt(5.0 / (12.0 * _PI))
_C7 = _PI / 4.0 * 3.0 * math.sqrt(5.0 / (48.0 * _PI))

_INV_F = 1.0 / 608.365


def _estimate_light_kernel(img_ref, dep_ref, depu_ref, depd_ref, alb_ref, g_ref,
                           *, H, W, TILE_H, HB):
    """One (batch, row-tile) step: writes the 12x12 partial Gram block
    G[c, 3+j]   = sum_pixels img_c * A_j   (-> Atb)
    G[3+i, 3+j] = sum_pixels A_i   * A_j   (-> AtA)."""
    f32 = jnp.float32
    t = pl.program_id(1)
    row0 = t * TILE_H

    img = (img_ref[...][0].astype(f32) + 1.0) * 0.5        # (3, TILE_H, W)
    d = (dep_ref[...][0, 0].astype(f32) + 1.0) * 0.5       # (TILE_H, W)
    rho = alb_ref[...][0, 0].astype(f32)                   # (TILE_H, W) albedo ch2 (ref quirk), not rescaled
    # halo rows: global rows row0-1 and row0+TILE_H (values at image borders are
    # clamped garbage but only feed border pixels, which the interior mask zeroes)
    d_above_edge = (depu_ref[...][0, 0, HB - 1:HB, :].astype(f32) + 1.0) * 0.5   # (1, W)
    d_below_edge = (depd_ref[...][0, 0, 0:1, :].astype(f32) + 1.0) * 0.5         # (1, W)

    # binary mask: 1 where scaled channel-0 of the image is nonzero
    mask = jnp.where(img[0] != 0.0, 1.0, 0.0).astype(f32)  # (TILE_H, W)
    img_m = img * mask                                     # (3, TILE_H, W)

    rloc = lax.broadcasted_iota(jnp.int32, (TILE_H, W), 0)
    cloc = lax.broadcasted_iota(jnp.int32, (TILE_H, W), 1)
    grow = rloc + row0
    cx = (cloc.astype(f32) - 256.0) * _INV_F
    cy = (grow.astype(f32) - 256.0) * _INV_F

    # neighbour depths: 4 rolls total; tile-edge rows patched from the halo blocks
    d_up = jnp.roll(d, 1, axis=0)
    d_up = jnp.where(rloc == 0, d_above_edge, d_up)
    d_dn = jnp.roll(d, -1, axis=0)
    d_dn = jnp.where(rloc == TILE_H - 1, d_below_edge, d_dn)
    d_lf = jnp.roll(d, 1, axis=1)
    d_rt = jnp.roll(d, -1, axis=1)

    # p = ((col-256)/f * depth, (row-256)/f * depth, depth); neighbour points are
    # rebuilt analytically from neighbour depth + shifted grid constant.
    cxd = cx * d
    cyd = cy * d
    dmr = d - d_rt
    dml = d - d_lf
    dnd = d_dn - d
    dud = d_up - d
    vw = (cxd - (cx + _INV_F) * d_rt, cy * dmr, dmr)               # p_ctr   - p_right
    vs = (cx * dnd, (cy + _INV_F) * d_dn - cyd, dnd)               # p_below - p_ctr
    ve = (cxd - (cx - _INV_F) * d_lf, cy * dml, dml)               # p_ctr   - p_left
    vn = (cx * dud, (cy - _INV_F) * d_up - cyd, dud)               # p_above - p_ctr

    def cross(a, b):
        return (a[1] * b[2] - a[2] * b[1],
                a[2] * b[0] - a[0] * b[2],
                a[0] * b[1] - a[1] * b[0])

    n1 = cross(vw, vs)
    n2 = cross(ve, vn)
    nx = n1[0] + n2[0]
    ny = n1[1] + n2[1]
    nz = n1[2] + n2[2]

    nsq = nx * nx + ny * ny + nz * nz
    inv_mag = lax.rsqrt(jnp.maximum(nsq, 1e-20))   # EUP; eps fixes the 0-normal NaN hazard
    ux = nx * inv_mag
    uy = ny * inv_mag
    uz = nz * inv_mag
    nmag = nsq * inv_mag                           # == sqrt(nsq) away from the eps clamp

    interior = ((grow >= 1) & (grow <= H - 2) & (cloc >= 1) & (cloc <= W - 2))
    # A_j = N_j * rho * mask; every N_j already carries the interior zero-padding,
    # so fold interior + pixel mask + albedo into a single weight map.
    w = interior.astype(f32) * (rho * mask)

    rnm = nmag * w
    rx = nx * w          # unnormalized components (reference's normal_*_pad)
    ry = ny * w
    rz = nz * w

    x2 = ux * ux
    y2 = uy * uy
    z2 = uz * uz

    a0 = _C0 * rnm
    a1 = _C1 * rz
    a2 = _C1 * rx
    a3 = _C1 * ry
    a4 = _C4 * ((2.0 * z2 - x2 - y2) * rnm)
    a5 = _C5 * ((ux * uz) * rnm)
    a6 = _C5 * ((uy * uz) * rnm)
    a7 = _C7 * ((x2 - y2) * rnm)
    a8 = _C5 * ((ux * uy) * rnm)

    # (12, K): rows 0-2 = masked image (b), rows 3-11 = A; contract pixels on the MXU.
    m12 = jnp.stack([img_m[0], img_m[1], img_m[2],
                     a0, a1, a2, a3, a4, a5, a6, a7, a8], axis=0)   # (12, TILE_H, W)
    m2 = m12.reshape(12, TILE_H * W)
    g = lax.dot_general(m2, m2, (((1,), (1,)), ((), ())),
                        preferred_element_type=jnp.float32)         # (12, 12)
    g_ref[...] = g[None, None, :, :]


def _pick_tile_h(H, W):
    """Largest row-tile that divides H, is a multiple of 8 and keeps a tile at
    <= ~64K pixels, so live VMEM is bounded independent of resolution."""
    if H % 8 != 0:
        return H  # odd sizes: single tile (block == full array is always legal)
    cap = max(8, min(H, ((64 * 1024) // max(W, 1)) // 8 * 8))
    best = 8
    for cand in range(8, H + 1, 8):
        if H % cand == 0 and cand <= cap:
            best = cand
    return best


@jax.jit
def estimate_light(input_img, depth_target, albedo):
    B, C, H, W = input_img.shape
    assert H == W, "reference module assumes square images"
    assert C == 3 and albedo.shape[1] == 3

    TILE_H = _pick_tile_h(H, W)
    T = H // TILE_H
    HB = 8 if H % 8 == 0 else H          # halo block height (one row of it is used)
    R = TILE_H // HB
    n_hblk = H // HB

    kernel = functools.partial(_estimate_light_kernel, H=H, W=W,
                               TILE_H=TILE_H, HB=HB)

    img_spec = pl.BlockSpec((1, C, TILE_H, W), lambda b, t: (b, 0, t, 0))
    dep_spec = pl.BlockSpec((1, 1, TILE_H, W), lambda b, t: (b, 0, t, 0))
    # halo blocks: the HB-row block containing the row just above / below the tile;
    # clamped at the image border (the stencil output there is masked anyway).
    depu_spec = pl.BlockSpec(
        (1, 1, HB, W), lambda b, t: (b, 0, jnp.maximum(t * R - 1, 0), 0))
    depd_spec = pl.BlockSpec(
        (1, 1, HB, W), lambda b, t: (b, 0, jnp.minimum(t * R + R, n_hblk - 1), 0))
    alb_spec = pl.BlockSpec((1, 1, TILE_H, W), lambda b, t: (b, C - 1, t, 0))

    g = pl.pallas_call(
        kernel,
        out_shape=jax.ShapeDtypeStruct((B, T, 12, 12), jnp.float32),
        grid_spec=pltpu.PrefetchScalarGridSpec(
            num_scalar_prefetch=0,
            grid=(B, T),
            in_specs=[img_spec, dep_spec, depu_spec, depd_spec, alb_spec],
            out_specs=pl.BlockSpec((1, 1, 12, 12), lambda b, t: (b, t, 0, 0)),
        ),
        compiler_params=pltpu.CompilerParams(
            dimension_semantics=("parallel", "parallel"),
            vmem_limit_bytes=48 * 1024 * 1024,   # headroom under v7x's 64 MiB VMEM
        ),
    )(input_img, depth_target, depth_target, depth_target, albedo)

    gs = jnp.sum(g, axis=1)          # (B, 12, 12): per-tile partial Grams summed
    ata = gs[:, 3:, 3:]              # (B, 9, 9)
    atb = gs[:, :3, 3:]              # (B, 3, 9)

    # torch.gels equivalent via normal equations.  Rows the reference drops via the
    # mask are exactly the all-zero A rows here, so solutions coincide for
    # full-rank systems; a tiny relative ridge keeps degenerate inputs finite.
    # TODO(synk): a pivoted QR / lstsq would match gels for rank-deficient A.
    ridge = 1e-8 * (jnp.trace(ata, axis1=-2, axis2=-1) / 9.0) + 1e-30
    ata_r = ata + ridge[:, None, None] * jnp.eye(9, dtype=ata.dtype)
    sol = jnp.linalg.solve(ata_r, jnp.swapaxes(atb, 1, 2))   # (B, 9, 3)
    return jnp.swapaxes(sol, 1, 2)                           # (B, 3, 9)


if __name__ == "__main__":
    key = jax.random.PRNGKey(0)
    k1, k2, k3 = jax.random.split(key, 3)
    B, C, H, W = 2, 3, 16, 16
    input_img = jax.random.uniform(k1, (B, C, H, W), jnp.float32, -1.0, 1.0)
    # force a few channel-0 pixels to exactly -1 so the mask path is exercised
    input_img = input_img.at[:, 0, 0, :4].set(-1.0)
    depth_target = jax.random.uniform(k2, (B, 1, H, W), jnp.float32, -1.0, 1.0)
    albedo = jax.random.uniform(k3, (B, C, H, W), jnp.float32, 0.0, 1.0)

    S = estimate_light(input_img, depth_target, albedo)
    S = jax.block_until_ready(S)
    assert S.shape == (B, 3, 9), S.shape
    assert bool(jnp.all(jnp.isfinite(S)))
    print("KERNEL_OK")
</pallas_src>

<mosaic_0001>
module attributes {stable_mosaic.version = 11 : i64} {
  func.func @_estimate_light_kernel(%arg0: i32, %arg1: i32, %arg2: memref<1x3x16x16xf32, #tpu.memory_space<vmem>>, %arg3: memref<1x1x16x16xf32, #tpu.memory_space<vmem>>, %arg4: memref<1x1x8x16xf32, #tpu.memory_space<vmem>>, %arg5: memref<1x1x8x16xf32, #tpu.memory_space<vmem>>, %arg6: memref<1x1x16x16xf32, #tpu.memory_space<vmem>>, %arg7: memref<1x1x12x12xf32, #tpu.memory_space<vmem>>) attributes {dimension_semantics = [#tpu.dimension_semantics<parallel>, #tpu.dimension_semantics<parallel>], iteration_bounds = array<i64: 2, 1>, scalar_prefetch = 0 : i64, scratch_operands = 0 : i64, tpu.core_type = #tpu.core_type<tc>, window_params = [{transform_indices = @transform_0, window_bounds = array<i64: 1, 3, 16, 16>}, {transform_indices = @transform_1, window_bounds = array<i64: 1, 1, 16, 16>}, {transform_indices = @transform_2, window_bounds = array<i64: 1, 1, 8, 16>}, {transform_indices = @transform_3, window_bounds = array<i64: 1, 1, 8, 16>}, {transform_indices = @transform_4, window_bounds = array<i64: 1, 1, 16, 16>}, {transform_indices = @transform_5, window_bounds = array<i64: 1, 1, 12, 12>}]} {
    %c16_i32 = arith.constant 16 : i32
    %0 = arith.muli %arg1, %c16_i32 : i32
    %c0 = arith.constant 0 : index
    %c0_0 = arith.constant 0 : index
    %c0_1 = arith.constant 0 : index
    %c0_2 = arith.constant 0 : index
    %1 = vector.load %arg2[%c0, %c0_0, %c0_1, %c0_2] : memref<1x3x16x16xf32, #tpu.memory_space<vmem>>, vector<1x3x16x16xf32>
    %2 = vector.shape_cast %1 : vector<1x3x16x16xf32> to vector<3x16x16xf32>
    %cst = arith.constant 1.000000e+00 : f32
    %3 = vector.broadcast %cst : f32 to vector<3x16x16xf32>
    %4 = arith.addf %2, %3 : vector<3x16x16xf32>
    %cst_3 = arith.constant 5.000000e-01 : f32
    %5 = vector.broadcast %cst_3 : f32 to vector<3x16x16xf32>
    %6 = arith.mulf %4, %5 : vector<3x16x16xf32>
    %c0_4 = arith.constant 0 : index
    %c0_5 = arith.constant 0 : index
    %c0_6 = arith.constant 0 : index
    %c0_7 = arith.constant 0 : index
    %7 = vector.load %arg3[%c0_4, %c0_5, %c0_6, %c0_7] : memref<1x1x16x16xf32, #tpu.memory_space<vmem>>, vector<1x1x16x16xf32>
    %8 = vector.shape_cast %7 : vector<1x1x16x16xf32> to vector<16x16xf32>
    %cst_8 = arith.constant 1.000000e+00 : f32
    %9 = vector.broadcast %cst_8 : f32 to vector<16x16xf32>
    %10 = arith.addf %8, %9 : vector<16x16xf32>
    %cst_9 = arith.constant 5.000000e-01 : f32
    %11 = vector.broadcast %cst_9 : f32 to vector<16x16xf32>
    %12 = arith.mulf %10, %11 : vector<16x16xf32>
    %c0_10 = arith.constant 0 : index
    %c0_11 = arith.constant 0 : index
    %c0_12 = arith.constant 0 : index
    %c0_13 = arith.constant 0 : index
    %13 = vector.load %arg6[%c0_10, %c0_11, %c0_12, %c0_13] : memref<1x1x16x16xf32, #tpu.memory_space<vmem>>, vector<1x1x16x16xf32>
    %14 = vector.shape_cast %13 : vector<1x1x16x16xf32> to vector<16x16xf32>
    %c0_14 = arith.constant 0 : index
    %c0_15 = arith.constant 0 : index
    %c0_16 = arith.constant 0 : index
    %c0_17 = arith.constant 0 : index
    %15 = vector.load %arg4[%c0_14, %c0_15, %c0_16, %c0_17] : memref<1x1x8x16xf32, #tpu.memory_space<vmem>>, vector<1x1x8x16xf32>
    %16 = vector.extract_strided_slice %15 {offsets = [0, 0, 7, 0], sizes = [1, 1, 1, 16], strides = [1, 1, 1, 1]} : vector<1x1x8x16xf32> to vector<1x1x1x16xf32>
    %17 = vector.shape_cast %16 : vector<1x1x1x16xf32> to vector<1x16xf32>
    %cst_18 = arith.constant 1.000000e+00 : f32
    %18 = vector.broadcast %cst_18 : f32 to vector<1x16xf32>
    %19 = arith.addf %17, %18 : vector<1x16xf32>
    %cst_19 = arith.constant 5.000000e-01 : f32
    %20 = vector.broadcast %cst_19 : f32 to vector<1x16xf32>
    %21 = arith.mulf %19, %20 : vector<1x16xf32>
    %c0_20 = arith.constant 0 : index
    %c0_21 = arith.constant 0 : index
    %c0_22 = arith.constant 0 : index
    %c0_23 = arith.constant 0 : index
    %22 = vector.load %arg5[%c0_20, %c0_21, %c0_22, %c0_23] : memref<1x1x8x16xf32, #tpu.memory_space<vmem>>, vector<1x1x8x16xf32>
    %23 = vector.extract_strided_slice %22 {offsets = [0, 0, 0, 0], sizes = [1, 1, 1, 16], strides = [1, 1, 1, 1]} : vector<1x1x8x16xf32> to vector<1x1x1x16xf32>
    %24 = vector.shape_cast %23 : vector<1x1x1x16xf32> to vector<1x16xf32>
    %cst_24 = arith.constant 1.000000e+00 : f32
    %25 = vector.broadcast %cst_24 : f32 to vector<1x16xf32>
    %26 = arith.addf %24, %25 : vector<1x16xf32>
    %cst_25 = arith.constant 5.000000e-01 : f32
    %27 = vector.broadcast %cst_25 : f32 to vector<1x16xf32>
    %28 = arith.mulf %26, %27 : vector<1x16xf32>
    %29 = vector.extract_strided_slice %6 {offsets = [0, 0, 0], sizes = [1, 16, 16], strides = [1, 1, 1]} : vector<3x16x16xf32> to vector<1x16x16xf32>
    %30 = vector.shape_cast %29 : vector<1x16x16xf32> to vector<16x16xf32>
    %cst_26 = arith.constant 0.000000e+00 : f32
    %31 = vector.broadcast %cst_26 : f32 to vector<16x16xf32>
    %32 = arith.cmpf one, %30, %31 : vector<16x16xf32>
    %cst_27 = arith.constant 1.000000e+00 : f32
    %cst_28 = arith.constant 0.000000e+00 : f32
    %33 = vector.broadcast %cst_27 : f32 to vector<16x16xf32>
    %34 = vector.broadcast %cst_28 : f32 to vector<16x16xf32>
    %35 = arith.select %32, %33, %34 : vector<16x16xi1>, vector<16x16xf32>
    %36 = vector.shape_cast %35 : vector<16x16xf32> to vector<1x16x16xf32>
    %37 = vector.broadcast %36 : vector<1x16x16xf32> to vector<3x16x16xf32>
    %38 = arith.mulf %6, %37 : vector<3x16x16xf32>
    %39 = tpu.iota {dimensions = array<i32: 0>} : vector<16x16xi32>
    %40 = tpu.iota {dimensions = array<i32: 1>} : vector<16x16xi32>
    %41 = vector.broadcast %0 : i32 to vector<16x16xi32>
    %42 = arith.addi %39, %41 : vector<16x16xi32>
    %43 = arith.sitofp %40 : vector<16x16xi32> to vector<16x16xf32>
    %cst_29 = arith.constant 2.560000e+02 : f32
    %44 = vector.broadcast %cst_29 : f32 to vector<16x16xf32>
    %45 = arith.subf %43, %44 : vector<16x16xf32>
    %cst_30 = arith.constant 1.643750e-03 : f32
    %46 = vector.broadcast %cst_30 : f32 to vector<16x16xf32>
    %47 = arith.mulf %45, %46 : vector<16x16xf32>
    %48 = arith.sitofp %42 : vector<16x16xi32> to vector<16x16xf32>
    %cst_31 = arith.constant 2.560000e+02 : f32
    %49 = vector.broadcast %cst_31 : f32 to vector<16x16xf32>
    %50 = arith.subf %48, %49 : vector<16x16xf32>
    %cst_32 = arith.constant 1.643750e-03 : f32
    %51 = vector.broadcast %cst_32 : f32 to vector<16x16xf32>
    %52 = arith.mulf %50, %51 : vector<16x16xf32>
    %53 = vector.extract_strided_slice %12 {offsets = [15, 0], sizes = [1, 16], strides = [1, 1]} : vector<16x16xf32> to vector<1x16xf32>
    %54 = vector.extract_strided_slice %12 {offsets = [0, 0], sizes = [15, 16], strides = [1, 1]} : vector<16x16xf32> to vector<15x16xf32>
    %55 = tpu.concatenate %53, %54 in 0 : vector<1x16xf32>, vector<15x16xf32> -> vector<16x16xf32>
    %c0_i32 = arith.constant 0 : i32
    %56 = vector.broadcast %c0_i32 : i32 to vector<16x16xi32>
    %57 = arith.cmpi eq, %39, %56 : vector<16x16xi32>
    %58 = vector.shape_cast %21 : vector<1x16xf32> to vector<1x16xf32>
    %59 = vector.broadcast %58 : vector<1x16xf32> to vector<16x16xf32>
    %60 = arith.select %57, %59, %55 : vector<16x16xi1>, vector<16x16xf32>
    %61 = vector.extract_strided_slice %12 {offsets = [1, 0], sizes = [15, 16], strides = [1, 1]} : vector<16x16xf32> to vector<15x16xf32>
    %62 = vector.extract_strided_slice %12 {offsets = [0, 0], sizes = [1, 16], strides = [1, 1]} : vector<16x16xf32> to vector<1x16xf32>
    %63 = tpu.concatenate %61, %62 in 0 : vector<15x16xf32>, vector<1x16xf32> -> vector<16x16xf32>
    %c15_i32 = arith.constant 15 : i32
    %64 = vector.broadcast %c15_i32 : i32 to vector<16x16xi32>
    %65 = arith.cmpi eq, %39, %64 : vector<16x16xi32>
    %66 = vector.shape_cast %28 : vector<1x16xf32> to vector<1x16xf32>
    %67 = vector.broadcast %66 : vector<1x16xf32> to vector<16x16xf32>
    %68 = arith.select %65, %67, %63 : vector<16x16xi1>, vector<16x16xf32>
    %69 = vector.extract_strided_slice %12 {offsets = [0, 15], sizes = [16, 1], strides = [1, 1]} : vector<16x16xf32> to vector<16x1xf32>
    %70 = vector.extract_strided_slice %12 {offsets = [0, 0], sizes = [16, 15], strides = [1, 1]} : vector<16x16xf32> to vector<16x15xf32>
    %71 = tpu.concatenate %69, %70 in 1 : vector<16x1xf32>, vector<16x15xf32> -> vector<16x16xf32>
    %72 = vector.extract_strided_slice %12 {offsets = [0, 1], sizes = [16, 15], strides = [1, 1]} : vector<16x16xf32> to vector<16x15xf32>
    %73 = vector.extract_strided_slice %12 {offsets = [0, 0], sizes = [16, 1], strides = [1, 1]} : vector<16x16xf32> to vector<16x1xf32>
    %74 = tpu.concatenate %72, %73 in 1 : vector<16x15xf32>, vector<16x1xf32> -> vector<16x16xf32>
    %75 = arith.mulf %47, %12 : vector<16x16xf32>
    %76 = arith.mulf %52, %12 : vector<16x16xf32>
    %77 = arith.subf %12, %74 : vector<16x16xf32>
    %78 = arith.subf %12, %71 : vector<16x16xf32>
    %79 = arith.subf %68, %12 : vector<16x16xf32>
    %80 = arith.subf %60, %12 : vector<16x16xf32>
    %cst_33 = arith.constant 1.643750e-03 : f32
    %81 = vector.broadcast %cst_33 : f32 to vector<16x16xf32>
    %82 = arith.addf %47, %81 : vector<16x16xf32>
    %83 = arith.mulf %82, %74 : vector<16x16xf32>
    %84 = arith.subf %75, %83 : vector<16x16xf32>
    %85 = arith.mulf %52, %77 : vector<16x16xf32>
    %86 = arith.mulf %47, %79 : vector<16x16xf32>
    %cst_34 = arith.constant 1.643750e-03 : f32
    %87 = vector.broadcast %cst_34 : f32 to vector<16x16xf32>
    %88 = arith.addf %52, %87 : vector<16x16xf32>
    %89 = arith.mulf %88, %68 : vector<16x16xf32>
    %90 = arith.subf %89, %76 : vector<16x16xf32>
    %cst_35 = arith.constant 1.643750e-03 : f32
    %91 = vector.broadcast %cst_35 : f32 to vector<16x16xf32>
    %92 = arith.subf %47, %91 : vector<16x16xf32>
    %93 = arith.mulf %92, %71 : vector<16x16xf32>
    %94 = arith.subf %75, %93 : vector<16x16xf32>
    %95 = arith.mulf %52, %78 : vector<16x16xf32>
    %96 = arith.mulf %47, %80 : vector<16x16xf32>
    %cst_36 = arith.constant 1.643750e-03 : f32
    %97 = vector.broadcast %cst_36 : f32 to vector<16x16xf32>
    %98 = arith.subf %52, %97 : vector<16x16xf32>
    %99 = arith.mulf %98, %60 : vector<16x16xf32>
    %100 = arith.subf %99, %76 : vector<16x16xf32>
    %101 = arith.mulf %85, %79 : vector<16x16xf32>
    %102 = arith.mulf %77, %90 : vector<16x16xf32>
    %103 = arith.subf %101, %102 : vector<16x16xf32>
    %104 = arith.mulf %77, %86 : vector<16x16xf32>
    %105 = arith.mulf %84, %79 : vector<16x16xf32>
    %106 = arith.subf %104, %105 : vector<16x16xf32>
    %107 = arith.mulf %84, %90 : vector<16x16xf32>
    %108 = arith.mulf %85, %86 : vector<16x16xf32>
    %109 = arith.subf %107, %108 : vector<16x16xf32>
    %110 = arith.mulf %95, %80 : vector<16x16xf32>
    %111 = arith.mulf %78, %100 : vector<16x16xf32>
    %112 = arith.subf %110, %111 : vector<16x16xf32>
    %113 = arith.mulf %78, %96 : vector<16x16xf32>
    %114 = arith.mulf %94, %80 : vector<16x16xf32>
    %115 = arith.subf %113, %114 : vector<16x16xf32>
    %116 = arith.mulf %94, %100 : vector<16x16xf32>
    %117 = arith.mulf %95, %96 : vector<16x16xf32>
    %118 = arith.subf %116, %117 : vector<16x16xf32>
    %119 = arith.addf %103, %112 : vector<16x16xf32>
    %120 = arith.addf %106, %115 : vector<16x16xf32>
    %121 = arith.addf %109, %118 : vector<16x16xf32>
    %122 = arith.mulf %119, %119 : vector<16x16xf32>
    %123 = arith.mulf %120, %120 : vector<16x16xf32>
    %124 = arith.addf %122, %123 : vector<16x16xf32>
    %125 = arith.mulf %121, %121 : vector<16x16xf32>
    %126 = arith.addf %124, %125 : vector<16x16xf32>
    %cst_37 = arith.constant 9.99999968E-21 : f32
    %127 = vector.broadcast %cst_37 : f32 to vector<16x16xf32>
    %128 = arith.maximumf %126, %127 : vector<16x16xf32>
    %129 = math.rsqrt %128 : vector<16x16xf32>
    %130 = arith.mulf %119, %129 : vector<16x16xf32>
    %131 = arith.mulf %120, %129 : vector<16x16xf32>
    %132 = arith.mulf %121, %129 : vector<16x16xf32>
    %133 = arith.mulf %126, %129 : vector<16x16xf32>
    %c1_i32 = arith.constant 1 : i32
    %134 = vector.broadcast %c1_i32 : i32 to vector<16x16xi32>
    %135 = arith.cmpi sge, %42, %134 : vector<16x16xi32>
    %c14_i32 = arith.constant 14 : i32
    %136 = vector.broadcast %c14_i32 : i32 to vector<16x16xi32>
    %137 = arith.cmpi sle, %42, %136 : vector<16x16xi32>
    %138 = arith.andi %135, %137 : vector<16x16xi1>
    %c1_i32_38 = arith.constant 1 : i32
    %139 = vector.broadcast %c1_i32_38 : i32 to vector<16x16xi32>
    %140 = arith.cmpi sge, %40, %139 : vector<16x16xi32>
    %141 = arith.andi %138, %140 : vector<16x16xi1>
    %c14_i32_39 = arith.constant 14 : i32
    %142 = vector.broadcast %c14_i32_39 : i32 to vector<16x16xi32>
    %143 = arith.cmpi sle, %40, %142 : vector<16x16xi32>
    %144 = arith.andi %141, %143 : vector<16x16xi1>
    %145 = arith.extui %144 : vector<16x16xi1> to vector<16x16xi32>
    %146 = arith.sitofp %145 : vector<16x16xi32> to vector<16x16xf32>
    %147 = arith.mulf %14, %35 : vector<16x16xf32>
    %148 = arith.mulf %146, %147 : vector<16x16xf32>
    %149 = arith.mulf %133, %148 : vector<16x16xf32>
    %150 = arith.mulf %119, %148 : vector<16x16xf32>
    %151 = arith.mulf %120, %148 : vector<16x16xf32>
    %152 = arith.mulf %121, %148 : vector<16x16xf32>
    %153 = arith.mulf %130, %130 : vector<16x16xf32>
    %154 = arith.mulf %131, %131 : vector<16x16xf32>
    %155 = arith.mulf %132, %132 : vector<16x16xf32>
    %cst_40 = arith.constant 0.886226534 : f32
    %156 = vector.broadcast %cst_40 : f32 to vector<16x16xf32>
    %157 = arith.mulf %156, %149 : vector<16x16xf32>
    %cst_41 = arith.constant 1.02332628 : f32
    %158 = vector.broadcast %cst_41 : f32 to vector<16x16xf32>
    %159 = arith.mulf %158, %152 : vector<16x16xf32>
    %cst_42 = arith.constant 1.02332628 : f32
    %160 = vector.broadcast %cst_42 : f32 to vector<16x16xf32>
    %161 = arith.mulf %160, %150 : vector<16x16xf32>
    %cst_43 = arith.constant 1.02332628 : f32
    %162 = vector.broadcast %cst_43 : f32 to vector<16x16xf32>
    %163 = arith.mulf %162, %151 : vector<16x16xf32>
    %cst_44 = arith.constant 2.000000e+00 : f32
    %164 = vector.broadcast %cst_44 : f32 to vector<16x16xf32>
    %165 = arith.mulf %164, %155 : vector<16x16xf32>
    %166 = arith.subf %165, %153 : vector<16x16xf32>
    %167 = arith.subf %166, %154 : vector<16x16xf32>
    %168 = arith.mulf %167, %149 : vector<16x16xf32>
    %cst_45 = arith.constant 0.247707859 : f32
    %169 = vector.broadcast %cst_45 : f32 to vector<16x16xf32>
    %170 = arith.mulf %169, %168 : vector<16x16xf32>
    %171 = arith.mulf %130, %132 : vector<16x16xf32>
    %172 = arith.mulf %171, %149 : vector<16x16xf32>
    %cst_46 = arith.constant 0.858085155 : f32
    %173 = vector.broadcast %cst_46 : f32 to vector<16x16xf32>
    %174 = arith.mulf %173, %172 : vector<16x16xf32>
    %175 = arith.mulf %131, %132 : vector<16x16xf32>
    %176 = arith.mulf %175, %149 : vector<16x16xf32>
    %cst_47 = arith.constant 0.858085155 : f32
    %177 = vector.broadcast %cst_47 : f32 to vector<16x16xf32>
    %178 = arith.mulf %177, %176 : vector<16x16xf32>
    %179 = arith.subf %153, %154 : vector<16x16xf32>
    %180 = arith.mulf %179, %149 : vector<16x16xf32>
    %cst_48 = arith.constant 0.429042578 : f32
    %181 = vector.broadcast %cst_48 : f32 to vector<16x16xf32>
    %182 = arith.mulf %181, %180 : vector<16x16xf32>
    %183 = arith.mulf %130, %131 : vector<16x16xf32>
    %184 = arith.mulf %183, %149 : vector<16x16xf32>
    %cst_49 = arith.constant 0.858085155 : f32
    %185 = vector.broadcast %cst_49 : f32 to vector<16x16xf32>
    %186 = arith.mulf %185, %184 : vector<16x16xf32>
    %187 = vector.extract_strided_slice %38 {offsets = [0, 0, 0], sizes = [1, 16, 16], strides = [1, 1, 1]} : vector<3x16x16xf32> to vector<1x16x16xf32>
    %188 = vector.shape_cast %187 : vector<1x16x16xf32> to vector<16x16xf32>
    %189 = vector.extract_strided_slice %38 {offsets = [1, 0, 0], sizes = [1, 16, 16], strides = [1, 1, 1]} : vector<3x16x16xf32> to vector<1x16x16xf32>
    %190 = vector.shape_cast %189 : vector<1x16x16xf32> to vector<16x16xf32>
    %191 = vector.extract_strided_slice %38 {offsets = [2, 0, 0], sizes = [1, 16, 16], strides = [1, 1, 1]} : vector<3x16x16xf32> to vector<1x16x16xf32>
    %192 = vector.shape_cast %191 : vector<1x16x16xf32> to vector<16x16xf32>
    %193 = vector.shape_cast %188 : vector<16x16xf32> to vector<1x16x16xf32>
    %194 = vector.shape_cast %190 : vector<16x16xf32> to vector<1x16x16xf32>
    %195 = vector.shape_cast %192 : vector<16x16xf32> to vector<1x16x16xf32>
    %196 = vector.shape_cast %157 : vector<16x16xf32> to vector<1x16x16xf32>
    %197 = vector.shape_cast %159 : vector<16x16xf32> to vector<1x16x16xf32>
    %198 = vector.shape_cast %161 : vector<16x16xf32> to vector<1x16x16xf32>
    %199 = vector.shape_cast %163 : vector<16x16xf32> to vector<1x16x16xf32>
    %200 = vector.shape_cast %170 : vector<16x16xf32> to vector<1x16x16xf32>
    %201 = vector.shape_cast %174 : vector<16x16xf32> to vector<1x16x16xf32>
    %202 = vector.shape_cast %178 : vector<16x16xf32> to vector<1x16x16xf32>
    %203 = vector.shape_cast %182 : vector<16x16xf32> to vector<1x16x16xf32>
    %204 = vector.shape_cast %186 : vector<16x16xf32> to vector<1x16x16xf32>
    %205 = tpu.concatenate %193, %194, %195, %196, %197, %198, %199, %200, %201, %202, %203, %204 in 0 : vector<1x16x16xf32>, vector<1x16x16xf32>, vector<1x16x16xf32>, vector<1x16x16xf32>, vector<1x16x16xf32>, vector<1x16x16xf32>, vector<1x16x16xf32>, vector<1x16x16xf32>, vector<1x16x16xf32>, vector<1x16x16xf32>, vector<1x16x16xf32>, vector<1x16x16xf32> -> vector<12x16x16xf32>
    %206 = vector.shape_cast %205 : vector<12x16x16xf32> to vector<12x256xf32>
    %cst_50 = arith.constant dense<0.000000e+00> : vector<12x12xf32>
    %207 = tpu.matmul %206, %206, %cst_50 {dimension_numbers = #tpu.dot_dimension_numbers<[1], [1], [0], [0], [0, 0, 1, 0], [], []>} : vector<12x256xf32>, vector<12x256xf32>, vector<12x12xf32> -> vector<12x12xf32>
    %208 = vector.shape_cast %207 : vector<12x12xf32> to vector<1x1x12x12xf32>
    %c0_51 = arith.constant 0 : index
    %c0_52 = arith.constant 0 : index
    %c0_53 = arith.constant 0 : index
    %c0_54 = arith.constant 0 : index
    %209 = vector.load %arg7[%c0_51, %c0_52, %c0_53, %c0_54] : memref<1x1x12x12xf32, #tpu.memory_space<vmem>>, vector<1x1x12x12xf32>
    tpu.vector_store %arg7[%c0_51, %c0_52, %c0_53, %c0_54], %208 {strides = array<i32>} : memref<1x1x12x12xf32, #tpu.memory_space<vmem>>, vector<1x1x12x12xf32>,
    return
  }
  func.func @transform_0(%arg0: i32, %arg1: i32) -> (i32, i32, i32, i32) {
    %c0_i32 = arith.constant 0 : i32
    %c0_i32_0 = arith.constant 0 : i32
    %c0_i32_1 = arith.constant 0 : i32
    return %arg0, %c0_i32, %arg1, %c0_i32_0 : i32, i32, i32, i32
  }
  func.func @transform_1(%arg0: i32, %arg1: i32) -> (i32, i32, i32, i32) {
    %c0_i32 = arith.constant 0 : i32
    %c0_i32_0 = arith.constant 0 : i32
    %c0_i32_1 = arith.constant 0 : i32
    return %arg0, %c0_i32, %arg1, %c0_i32_0 : i32, i32, i32, i32
  }
  func.func @transform_2(%arg0: i32, %arg1: i32) -> (i32, i32, i32, i32) {
    %c2_i32 = arith.constant 2 : i32
    %0 = arith.muli %arg1, %c2_i32 : i32
    %c1_i32 = arith.constant 1 : i32
    %1 = arith.subi %0, %c1_i32 : i32
    %c0_i32 = arith.constant 0 : i32
    %2 = arith.maxsi %1, %c0_i32 : i32
    %c0_i32_0 = arith.constant 0 : i32
    %c0_i32_1 = arith.constant 0 : i32
    %c0_i32_2 = arith.constant 0 : i32
    return %arg0, %c0_i32_0, %2, %c0_i32_1 : i32, i32, i32, i32
  }
  func.func @transform_3(%arg0: i32, %arg1: i32) -> (i32, i32, i32, i32) {
    %c2_i32 = arith.constant 2 : i32
    %0 = arith.muli %arg1, %c2_i32 : i32
    %c2_i32_0 = arith.constant 2 : i32
    %1 = arith.addi %0, %c2_i32_0 : i32
    %c1_i32 = arith.constant 1 : i32
    %2 = arith.minsi %1, %c1_i32 : i32
    %c0_i32 = arith.constant 0 : i32
    %c0_i32_1 = arith.constant 0 : i32
    %c0_i32_2 = arith.constant 0 : i32
    return %arg0, %c0_i32, %2, %c0_i32_1 : i32, i32, i32, i32
  }
  func.func @transform_4(%arg0: i32, %arg1: i32) -> (i32, i32, i32, i32) {
    %c2_i32 = arith.constant 2 : i32
    %c0_i32 = arith.constant 0 : i32
    %c0_i32_0 = arith.constant 0 : i32
    return %arg0, %c2_i32, %arg1, %c0_i32 : i32, i32, i32, i32
  }
  func.func @transform_5(%arg0: i32, %arg1: i32) -> (i32, i32, i32, i32) {
    %c0_i32 = arith.constant 0 : i32
    %c0_i32_0 = arith.constant 0 : i32
    %c0_i32_1 = arith.constant 0 : i32
    return %arg0, %arg1, %c0_i32, %c0_i32_0 : i32, i32, i32, i32
  }
}

</mosaic_0001>

<llo_original>
// kernel: custom-call.8
$region0: #{custom-call.8}
  %s0 = inlined_call_operand.vmem [shape: f32[2,9,9], index: 0, kind: input, shape index: {}]
  %s1 = inlined_call_operand.vmem [shape: f32[2,9,9], index: 1, kind: output, shape index: {0}]
  %s2 = inlined_call_operand.hbm [shape: s32[2,9], index: 2, kind: output, shape index: {1}]
  %s3 = inlined_call_operand.vmem [shape: s32[2,9], index: 3, kind: output, shape index: {2}]
  %4 = xla_tuple %s1, %s2, %s3
  $region1: #{custom-call.8} parent=0
    #allocation0 [shape = 'u8[16384]{0}', space=vmem, size = 0x4000, scoped, tag = 'operand span for operand 0']
    #allocation1 [shape = 'u8[16384]{0}', space=vmem, size = 0x4000, scoped, tag = 'operand span for operand 1']
    #allocation2 [shape = 'u8[4096]{0}', space=vmem, size = 0x1000, scoped, tag = 'operand span for operand 2']
    #allocation3 [shape = 'u8[2048]{0}', space=vmem, size = 0x800, scoped, tag = 'packed  for operand 2']
    #allocation4 [shape = 's32[2]{0}', space=sflag, size = 0x8, scoped, tag = 'scoped memory for custom-call.8']
    #allocation5 [shape = 'u8[4096]{0}', space=vmem, size = 0x1000, scoped, tag = 'operand span for operand 3']
    #allocation6 [shape = 'u8[2048]{0}', space=vmem, size = 0x800, scoped, tag = 'packed  for operand 3']
    %5 = vsyncpa [#allocation4], 0
    %s6 = scalar_lea.sflag [#allocation4], 1
    %7 = vsyncpa %s6, 0
    loop: start=0, step=1, limit=4
    $region2: #{custom-call.8} parent=1 // loop_pre_header
      _
    $region3: #{custom-call.8} parent=1 // loop_header
      %s9 = sphi 0, %s13
      %p10 = scmp.ge.s32.totalorder %s9, 4
      %s21 = sphi 0, %s23
      %s24 = sphi 0, %s21
      %s25 = sphi 0, %s24
      %s41 = sphi 0, %s25
      %s49 = sphi 0, %s51
      %s52 = sphi 0, %s49
      %s53 = sphi 0, %s52
      %s69 = sphi 0, %s53
    $region4: #{custom-call.8} parent=1 // loop_header_branch
      %12 = sbr.rel (%p10) target = $region8
    $region5: #{custom-call.8} parent=1 // loop_body
      %s14 = ssub.s32 %s9, 1
      %s15 = ssub.s32 %s9, 2
      %s16 = sadd.s32 %s9, 1
      %s17 = sshrl.u32 %s9, 3
      %s18 = sshrl.u32 %s16, 3
      %s19 = ssub.s32 %s17, %s18
      %p20 = scmp.eq.s32.totalorder %s19, 0
      %s22 = sadd.s32 %s21, 1
      %s23 = scalar_select %p20, %s21, %s22
      %p26 = pneg %p20
      %p27 = scmp.eq.s32.totalorder %s9, 1
      %p28 = por %p26, %p27
      %p29 = scmp.ne.s32.totalorder %s21, %s24
      %p30 = scmp.eq.s32.totalorder %s9, 0
      %p31 = por %p29, %p30
      %p32 = scmp.ne.s32.totalorder %s21, %s24
      %p33 = scmp.eq.s32.totalorder %s14, 1
      %p34 = por %p32, %p33
      %p35 = scmp.ne.s32.totalorder %s24, %s25
      %p36 = scmp.eq.s32.totalorder %s14, 0
      %p37 = por %p35, %p36
      %p38 = scmp.ne.s32.totalorder %s24, %s25
      %p39 = scmp.eq.s32.totalorder %s15, 1
      %p40 = por %p38, %p39
      %p42 = scmp.ne.s32.totalorder %s25, %s41
      %p43 = scmp.eq.s32.totalorder %s15, 0
      %p44 = por %p42, %p43
      %s45 = sshrl.u32 %s9, 3
      %s46 = sshrl.u32 %s16, 3
      %s47 = ssub.s32 %s45, %s46
      %p48 = scmp.eq.s32.totalorder %s47, 0
      %s50 = sadd.s32 %s49, 1
      %s51 = scalar_select %p48, %s49, %s50
      %p54 = pneg %p48
      %p55 = scmp.eq.s32.totalorder %s9, 1
      %p56 = por %p54, %p55
      %p57 = scmp.ne.s32.totalorder %s49, %s52
      %p58 = scmp.eq.s32.totalorder %s9, 0
      %p59 = por %p57, %p58
      %p60 = scmp.ne.s32.totalorder %s49, %s52
      %p61 = scmp.eq.s32.totalorder %s14, 1
      %p62 = por %p60, %p61
      %p63 = scmp.ne.s32.totalorder %s52, %s53
      %p64 = scmp.eq.s32.totalorder %s14, 0
      %p65 = por %p63, %p64
      %p66 = scmp.ne.s32.totalorder %s52, %s53
      %p67 = scmp.eq.s32.totalorder %s15, 1
      %p68 = por %p66, %p67
      %p70 = scmp.ne.s32.totalorder %s53, %s69
      %p71 = scmp.eq.s32.totalorder %s15, 0
      %p72 = por %p70, %p71
      %p73 = scmp.le.s32.totalorder 1, %s9
      %p74 = scmp.lt.s32.totalorder %s9, 3
      %p75 = pnand %p73, %p74
      %p76 = pneg %p75
      // Predicated region
      $region9: #{custom-call.8} parent=5 // pred_check
        _
      $region10: #{custom-call.8} parent=5 // pred_check_branch
        %78 = sbr.rel (%p75) target = $region12
      $region11: #{custom-call.8} parent=5 // pred_region
        %s79 = ssub.s32 %s9, 1
      $region12: #{custom-call.8} parent=5 // pred_fallthru
        _
      %p80 = scmp.lt.s32.totalorder %s9, 2
      // Predicated region
      $region13: #{custom-call.8} parent=5 // pred_check
        %p81 = pneg %p80
      $region14: #{custom-call.8} parent=5 // pred_check_branch
        %83 = sbr.rel (%p81) target = $region16
      $region15: #{custom-call.8} parent=5 // pred_region
        %s84 = sand.u32 %s9, 1
        %s85 = sand.u32 %s9, 1
        %s86 = smul.addr %s85, 16
        %s87 = scalar_lea.vmem [#allocation0], %s86
        %s88 = smul.addr %s9, 16
        %s89 = scalar_lea.vmem %s0, %s88
        // Predicated region
        $region17: #{custom-call.8} parent=15 // pred_check
          _
        $region18: #{custom-call.8} parent=15 // pred_check_branch
          %91 = sbr.rel (0) target = $region20
        $region19: #{custom-call.8} parent=15 // pred_region
          // Predicated region
          $region21: #{custom-call.8} parent=19 // pred_check
            _
          $region22: #{custom-call.8} parent=19 // pred_check_branch
            %93 = sbr.rel (0) target = $region24
          $region23: #{custom-call.8} parent=19 // pred_region
            loop: start=0, step=1, limit=1
            $region25: #{custom-call.8} parent=23 // loop_pre_header
              _
            $region26: #{custom-call.8} parent=23 // loop_header
              %s95 = sphi 0, %s99
              %p96 = scmp.ge.s32.totalorder %s95, 1
              %s100 = sphi %s89, %s89
              %s101 = sphi %s87, %s87
            $region27: #{custom-call.8} parent=23 // loop_header_branch
              %98 = sbr.rel (%p96) target = $region31
            $region28: #{custom-call.8} parent=23 // loop_body
              %v102 = vld [vmem:[%s100] sm:$0xff]
              %103 = vst [vmem:[%s101] sm:$0xff] %v102
              %v104 = vld [vmem:[%s100 + $0x8] sm:$0xff]
              %105 = vst [vmem:[%s101 + $0x8] sm:$0xff] %v104
            $region29: #{custom-call.8} parent=23 // loop_footer
              %s99 = sadd.s32 1, %s95
            $region30: #{custom-call.8} parent=23 // loop_footer_branch
              %94 = sbr.rel target = $region26
            $region31: #{custom-call.8} parent=23 // loop_exit
              _
          $region24: #{custom-call.8} parent=19 // pred_fallthru
            _
          // Predicated region
          $region32: #{custom-call.8} parent=19 // pred_check
            _
          $region33: #{custom-call.8} parent=19 // pred_check_branch
            %107 = sbr.rel target = $region35
          $region34: #{custom-call.8} parent=19 // pred_region
            _
          $region35: #{custom-call.8} parent=19 // pred_fallthru
            _
        $region20: #{custom-call.8} parent=15 // pred_fallthru
          _
        %108 = vnop
      $region16: #{custom-call.8} parent=5 // pred_fallthru
        _
      %p109 = scmp.le.s32.totalorder 1, %s9
      %p110 = scmp.lt.s32.totalorder %s9, 3
      %p111 = pnand %p109, %p110
      %p112 = pneg %p111
      // Predicated region
      $region36: #{custom-call.8} parent=5 // pred_check
        _
      $region37: #{custom-call.8} parent=5 // pred_check_branch
        %114 = sbr.rel (%p111) target = $region39
      $region38: #{custom-call.8} parent=5 // pred_region
        #allocation7 [shape = 's32[9,128]{1,0}', space=vmem, size = 0x2000, scoped, tag = 'scratch for permutations']
        %s115 = ssub.s32 %s9, 1
        %s116 = sand.u32 %s14, 1
        %s117 = sand.u32 %s14, 1
        %s118 = smul.addr %s117, 16
        %s119 = scalar_lea.vmem [#allocation0], %s118
        %s120 = sand.u32 %s14, 1
        %s121 = sand.u32 %s14, 1
        %s122 = smul.addr %s121, 16
        %s123 = scalar_lea.vmem [#allocation0], %s122
        %s124 = sand.u32 %s14, 1
        %s125 = sand.u32 %s14, 1
        %s126 = smul.addr %s125, 16
        %s127 = scalar_lea.vmem [#allocation1], %s126
        %p128 = pneg %p37
        %p129 = pneg %p34
        %s130 = sand.u32 %s24, 1
        %s131 = scalar_lea.sflag [#allocation4], %s130
        %s132 = sand.u32 %s24, 1
        %s133 = smul.addr %s132, 2
        %s134 = scalar_lea.vmem [#allocation3], %s133
        %p135 = pneg %p65
        %p136 = pneg %p62
        %s137 = sand.u32 %s52, 1
        %s138 = sand.u32 %s52, 1
        %s139 = smul.addr %s138, 2
        %s140 = scalar_lea.vmem [#allocation6], %s139
        %s141 = sshrl.u32 %s14, 3
        %s142 = sshrl.u32 %s14, 3
        %v143 = vld [vmem:[%s119] sm:$0xff]
        %144 = vst [vmem:[%s127] sm:$0xff] %v143
        %s145 = scalar_lea.vmem %s127, 8 [#allocation1]
        %s146 = scalar_lea.vmem %s119, 8 [#allocation0]
        %v147 = vld [vmem:[%s146] sm:$0xff]
        %148 = vst [vmem:[%s145] sm:$0xff] %v147
        %s149 = sand.u32 %s14, 7
        %s150 = scalar_lea.vmem [#allocation2], %s149
        %s151 = sand.u32 %s14, 7
        %s152 = scalar_lea.vmem [#allocation5], %s151
        %153 = vst [vmem:[%s150] sm:$0x1] 0
        %v154 = vlaneseq
        %v155 = vshrl.u32 %v154, 7
        %v156 = vmov %v155
        loop: start=0, step=1, limit=2
        $region40: #{custom-call.8} parent=38 // loop_pre_header
          _
        $region41: #{custom-call.8} parent=38 // loop_header
          %s158 = sphi 0, %s162
          %p159 = scmp.ge.s32.totalorder %s158, 2
        $region42: #{custom-call.8} parent=38 // loop_header_branch
          %161 = sbr.rel (%p159) target = $region46
        $region43: #{custom-call.8} parent=38 // loop_body
          %s163 = smul.addr %s158, 8
          %s164 = scalar_lea.vmem [#allocation7], %s163
          %s165 = smul.u32 %s158, 8
          %v166 = vstv %s165
          %v167 = vadd.s32 %v156, %v166
          %168 = vst [vmem:[%s164] sm:$0xff] %v167
        $region44: #{custom-call.8} parent=38 // loop_footer
          %s162 = sadd.s32 1, %s158
        $region45: #{custom-call.8} parent=38 // loop_footer_branch
          %157 = sbr.rel target = $region41
        $region46: #{custom-call.8} parent=38 // loop_exit
          _
        loop: start=0, step=1, limit=9
        $region47: #{custom-call.8} parent=38 // loop_pre_header
          _
        $region48: #{custom-call.8} parent=38 // loop_header
          %s170 = sphi 0, %s174
          %p171 = scmp.ge.s32.totalorder %s170, 9
        $region49: #{custom-call.8} parent=38 // loop_header_branch
          %173 = sbr.rel (%p171) target = $region53
        $region50: #{custom-call.8} parent=38 // loop_body
          %v175 = vstv %s170
          %v176 = vlaneseq
          %v177 = vshrl.u32 %v176, 7
          %v178 = vmov %v177
          %v179 = vld [vmem:[%s127] sm:$0xff]
          %v180 = vand.u32 2147483647, %v179
          %v182 = vstv %s170
          %vm183 = vcmp.ge.s32.totalorder %v178, %v182
          %vm184 = vcmp.lt.s32.totalorder %v178, 9
          %vm185 = vmand %vm183, %vm184
          %vm186 = vcmp.lt.f32.partialorder -inf, %v180
          %vm187 = vmand %vm185, %vm186
          %v188 = vsel %vm187, %v178, %v175
          %v189 = vsel %vm187, %v180, -inf
          %s190 = scalar_lea.vmem %s127, 8 [#allocation1]
          %v191 = vld [vmem:[%s190] sm:$0xff]
          %v192 = vand.u32 2147483647, %v191
          %v193 = vadd.s32 %v178, 8
          %v194 = vstv %s170
          %vm195 = vcmp.ge.s32.totalorder %v193, %v194
          %vm196 = vcmp.lt.s32.totalorder %v193, 9
          %vm197 = vmand %vm195, %vm196
          %vm198 = vcmp.lt.f32.partialorder %v189, %v192
          %vm199 = vmand %vm197, %vm198
          %v200 = vsel %vm199, %v193, %v188
          %v201 = vsel %vm199, %v192, %v189
          %v202 = vrot.slane %v201, 1
          %v203 = vrot.slane %v200, 1
          %vm204 = vcmp.ge.f32.partialorder %v202, %v201
          %v205 = vsel %vm204, %v202, %v201
          %v206 = vsel %vm204, %v203, %v200
          %v207 = vrot.slane %v202, 1
          %v208 = vrot.slane %v203, 1
          %vm209 = vcmp.ge.f32.partialorder %v207, %v205
          %v210 = vsel %vm209, %v207, %v205
          %v211 = vsel %vm209, %v208, %v206
          %v212 = vrot.slane %v207, 1
          %v213 = vrot.slane %v208, 1
          %vm214 = vcmp.ge.f32.partialorder %v212, %v210
          %v215 = vsel %vm214, %v212, %v210
          %v216 = vsel %vm214, %v213, %v211
          %v217 = vrot.slane %v212, 1
          %v218 = vrot.slane %v213, 1
          %vm219 = vcmp.ge.f32.partialorder %v217, %v215
          %v220 = vsel %vm219, %v217, %v215
          %v221 = vsel %vm219, %v218, %v216
          %v222 = vrot.slane %v217, 1
          %v223 = vrot.slane %v218, 1
          %vm224 = vcmp.ge.f32.partialorder %v222, %v220
          %v225 = vsel %vm224, %v222, %v220
          %v226 = vsel %vm224, %v223, %v221
          %v227 = vrot.slane %v222, 1
          %v228 = vrot.slane %v223, 1
          %vm229 = vcmp.ge.f32.partialorder %v227, %v225
          %v230 = vsel %vm229, %v227, %v225
          %v231 = vsel %vm229, %v228, %v226
          %v232 = vrot.slane %v227, 1
          %v233 = vrot.slane %v228, 1
          %vm234 = vcmp.ge.f32.partialorder %v232, %v230
          %v235 = vsel %vm234, %v232, %v230
          %v236 = vsel %vm234, %v233, %v231
          %s237 = ssub.s32 128, %s170
          %238 = vrot.lane.b32.xlu0 %v236, %s237
          %v239 = vpop.permute.xlu0 %238
          %s240 = vtos %v239
          %v241 = vstv %s170
          %v242 = vlaneseq
          %v243 = vand.u32 %v242, 127
          %vm244 = vcmp.eq.s32.totalorder %v243, %v241
          %v245 = vstv %s240
          %v246 = vld [vmem:[%s150] ss:$0 sm:$0xff]
          %v247 = vsel %vm244, %v245, %v246
          %248 = vst [vmem:[%s150] sm:$0x1] %v247
          %s249 = scalar_lea.vmem %s127, %s170 [#allocation1]
          %s250 = scalar_lea.vmem %s127, %s240 [#allocation1]
          %v251 = vld [vmem:[%s249] ss:$0 sm:$0xff]
          %v252 = vld [vmem:[%s250] ss:$0 sm:$0xff]
          %253 = vst [vmem:[%s250] sm:$0x1] %v251
          %254 = vst [vmem:[%s249] sm:$0x1] %v252
          %s255 = scalar_lea.vmem [#allocation7], %s170
          %s256 = scalar_lea.vmem [#allocation7], %s240
          %v257 = vld [vmem:[%s255] ss:$0 sm:$0xff]
          %v258 = vld [vmem:[%s256] ss:$0 sm:$0xff]
          %259 = vst [vmem:[%s256] sm:$0x1] %v257
          %260 = vst [vmem:[%s255] sm:$0x1] %v258
          %vm261 = vcmp.ne.f32.partialorder %v252, 0.0
          %vm262 = vmand %vm244, %vm261
          %v263 = vsel %vm262, %v252, 1.0
          %v264 = vlaneseq
          %v265 = vand.u32 %v264, 127
          %v266 = vstv %s170
          %vm267 = vcmp.gt.s32.totalorder %v265, %v266
          %v268 = vsel %vm267, %v252, 0.0
          %v269 = vlaneseq
          %v270 = vshrl.u32 %v269, 7
          %v271 = vmov %v270
          %v272 = vld [vmem:[%s127] sm:$0xff]
          %v274 = vstv %s170
          %vm275 = vcmp.gt.s32.totalorder %v271, %v274
          %v276 = vsel %vm275, %v263, 1.0
          %v277 = vrcp.pop %v276
          %v278 = vmul.f32 %v272, %v277
          %vm279 = vmand %vm275, %vm244
          %v280 = vsel %vm279, %v278, 0.0
          %281 = vadd.xlane.f32.xlu0 %v280
          %v282 = vpop.xlane.xlu0 %281
          %v283 = vmul.f32 %v282, %v268
          %v284 = vsub.f32 %v278, %v283
          %285 = vst [vmem:[%s127] sm:$0xff] %v284
          %s286 = scalar_lea.vmem %s127, 8 [#allocation1]
          %v287 = vld [vmem:[%s286] sm:$0xff]
          %v288 = vadd.s32 %v271, 8
          %v289 = vstv %s170
          %vm290 = vcmp.gt.s32.totalorder %v288, %v289
          %v291 = vsel %vm290, %v263, 1.0
          %v292 = vrcp.pop %v291
          %v293 = vmul.f32 %v287, %v292
          %vm294 = vmand %vm290, %vm244
          %v295 = vsel %vm294, %v293, 0.0
          %296 = vadd.xlane.f32.xlu0 %v295
          %v297 = vpop.xlane.xlu0 %296
          %v298 = vmul.f32 %v297, %v268
          %v299 = vsub.f32 %v293, %v298
          %300 = vst [vmem:[%s286] sm:$0xff] %v299
        $region51: #{custom-call.8} parent=38 // loop_footer
          %s174 = sadd.s32 1, %s170
        $region52: #{custom-call.8} parent=38 // loop_footer_branch
          %169 = sbr.rel target = $region48
        $region53: #{custom-call.8} parent=38 // loop_exit
          _
        %v301 = vld [vmem:[#allocation7] sm:$0xff]
        %s302 = scalar_lea.vmem [#allocation7], 8
        %v303 = vld [vmem:[%s302] sm:$0xff]
        %s304 = scalar_lea.vmem [#allocation7], 16
        %s305 = scalar_lea.vmem [#allocation7], 24
        %s306 = scalar_lea.vmem [#allocation7], 32
        %s307 = scalar_lea.vmem [#allocation7], 40
        %s308 = scalar_lea.vmem [#allocation7], 48
        %s309 = scalar_lea.vmem [#allocation7], 56
        %s310 = scalar_lea.vmem [#allocation7], 64
        %s311 = scalar_lea.vmem [#allocation7], 72
        %s312 = scalar_lea.vmem [#allocation7], 80
        %s313 = scalar_lea.vmem [#allocation7], 88
        %s314 = scalar_lea.vmem [#allocation7], 96
        %s315 = scalar_lea.vmem [#allocation7], 104
        %s316 = scalar_lea.vmem [#allocation7], 112
        %s317 = scalar_lea.vmem [#allocation7], 120
        %318 = vxpose.xlu0.b32.start [1/16] %v301, 128
        %319 = vxpose.xlu0.b32.cont [2/16] %v303, 128
        %320 = vxpose.xlu0.b32.cont [3/16] 0, 128
        %321 = vxpose.xlu0.b32.cont [4/16] 0, 128
        %322 = vxpose.xlu0.b32.cont [5/16] 0, 128
        %323 = vxpose.xlu0.b32.cont [6/16] 0, 128
        %324 = vxpose.xlu0.b32.cont [7/16] 0, 128
        %325 = vxpose.xlu0.b32.cont [8/16] 0, 128
        %326 = vxpose.xlu0.b32.cont [9/16] 0, 128
        %327 = vxpose.xlu0.b32.cont [10/16] 0, 128
        %328 = vxpose.xlu0.b32.cont [11/16] 0, 128
        %329 = vxpose.xlu0.b32.cont [12/16] 0, 128
        %330 = vxpose.xlu0.b32.cont [13/16] 0, 128
        %331 = vxpose.xlu0.b32.cont [14/16] 0, 128
        %332 = vxpose.xlu0.b32.cont [15/16] 0, 128
        %333 = vxpose.xlu0.b32.end [16/16] 0, 128
        %v334 = vpop.trf.xlu0
        %v335 = vpop.trf.xlu0
        %v336 = vpop.trf.xlu0
        %v337 = vpop.trf.xlu0
        %v338 = vpop.trf.xlu0
        %v339 = vpop.trf.xlu0
        %v340 = vpop.trf.xlu0
        %v341 = vpop.trf.xlu0
        %v342 = vpop.trf.xlu0
        %v343 = vpop.trf.xlu0
        %v344 = vpop.trf.xlu0
        %v345 = vpop.trf.xlu0
        %v346 = vpop.trf.xlu0
        %v347 = vpop.trf.xlu0
        %v348 = vpop.trf.xlu0
        %v349 = vpop.trf.xlu0
        %350 = vst [vmem:[%s152] sm:$0x1] %v334
        %s352 = sshllo.u32 0, 2
        %v354 = vld [vmem:[#allocation2] sm:%s352]
        %s355 = sshllo.u32 0, 2
        %356 = vst [vmem:[%s134] sm:%s355] %v354
        %s358 = sshllo.u32 0, 2
        %v360 = vld [vmem:[#allocation5] sm:%s358]
        %s361 = sshllo.u32 0, 2
        %362 = vst [vmem:[%s140] sm:%s361] %v360
        %s363 = sand.u32 %s14, 1
        %s364 = sand.u32 %s14, 1
        %s365 = smul.addr %s364, 16
        %s366 = scalar_lea.vmem [#allocation1], %s365
        %s367 = sand.u32 %s24, 1
        %s368 = scalar_lea.sflag [#allocation4], %s367
        %s369 = sand.u32 %s24, 1
        %s370 = smul.addr %s369, 2
        %s371 = scalar_lea.vmem [#allocation3], %s370
        %s372 = sand.u32 %s52, 1
        %s373 = sand.u32 %s52, 1
        %s374 = smul.addr %s373, 2
        %s375 = scalar_lea.vmem [#allocation6], %s374
        %s376 = smul.addr %s14, 16
        %s377 = scalar_lea.vmem %s1, %s376
        // Predicated region
        $region54: #{custom-call.8} parent=38 // pred_check
          _
        $region55: #{custom-call.8} parent=38 // pred_check_branch
          %379 = sbr.rel (0) target = $region57
        $region56: #{custom-call.8} parent=38 // pred_region
          // Predicated region
          $region58: #{custom-call.8} parent=56 // pred_check
            _
          $region59: #{custom-call.8} parent=56 // pred_check_branch
            %381 = sbr.rel (0) target = $region61
          $region60: #{custom-call.8} parent=56 // pred_region
            loop: start=0, step=1, limit=1
            $region62: #{custom-call.8} parent=60 // loop_pre_header
              _
            $region63: #{custom-call.8} parent=60 // loop_header
              %s383 = sphi 0, %s387
              %p384 = scmp.ge.s32.totalorder %s383, 1
              %s388 = sphi %s366, %s366
              %s389 = sphi %s377, %s377
            $region64: #{custom-call.8} parent=60 // loop_header_branch
              %386 = sbr.rel (%p384) target = $region68
            $region65: #{custom-call.8} parent=60 // loop_body
              %v390 = vld [vmem:[%s388] sm:$0xff]
              %391 = vst [vmem:[%s389] sm:$0xff] %v390
              %v392 = vld [vmem:[%s388 + $0x8] sm:$0xff]
              %393 = vst [vmem:[%s389 + $0x8] sm:$0xff] %v392
            $region66: #{custom-call.8} parent=60 // loop_footer
              %s387 = sadd.s32 1, %s383
            $region67: #{custom-call.8} parent=60 // loop_footer_branch
              %382 = sbr.rel target = $region63
            $region68: #{custom-call.8} parent=60 // loop_exit
              _
          $region61: #{custom-call.8} parent=56 // pred_fallthru
            _
          // Predicated region
          $region69: #{custom-call.8} parent=56 // pred_check
            _
          $region70: #{custom-call.8} parent=56 // pred_check_branch
            %395 = sbr.rel target = $region72
          $region71: #{custom-call.8} parent=56 // pred_region
            _
          $region72: #{custom-call.8} parent=56 // pred_fallthru
            _
        $region57: #{custom-call.8} parent=38 // pred_fallthru
          _
        %396 = vnop
        // Predicated region
        $region73: #{custom-call.8} parent=38 // pred_check
          %p397 = pneg %p34
        $region74: #{custom-call.8} parent=38 // pred_check_branch
          %399 = sbr.rel (%p397) target = $region76
        $region75: #{custom-call.8} parent=38 // pred_region
          %s400 = sshrl.u32 %s14, 3
          %s402 = ssub.s32 32, 32
          %403 = vsyncadd %s368, %s402
          %s404 = smul.addr %s400, 32
          %s405 = scalar_lea.hbm %s2, %s404
          %s407 = sshll.u32 %s371, 4
          %s408 = int_to_ptr.vmem [resolvable:$true] %s407
          %410 = dma.vmem_to_hbm [thread:$0]  %s408, 32, %s405, %s368
        $region76: #{custom-call.8} parent=38 // pred_fallthru
          _
        // Predicated region
        $region77: #{custom-call.8} parent=38 // pred_check
          %p411 = pneg %p62
        $region78: #{custom-call.8} parent=38 // pred_check_branch
          %413 = sbr.rel (%p411) target = $region80
        $region79: #{custom-call.8} parent=38 // pred_region
          %s414 = sshrl.u32 %s14, 3
          %s415 = smul.addr %s414, 2
          %s416 = scalar_lea.vmem %s3, %s415
          // Predicated region
          $region81: #{custom-call.8} parent=79 // pred_check
            _
          $region82: #{custom-call.8} parent=79 // pred_check_branch
            %418 = sbr.rel (0) target = $region84
          $region83: #{custom-call.8} parent=79 // pred_region
            // Predicated region
            $region85: #{custom-call.8} parent=83 // pred_check
              _
            $region86: #{custom-call.8} parent=83 // pred_check_branch
              %420 = sbr.rel target = $region88
            $region87: #{custom-call.8} parent=83 // pred_region
              // Predicated region
              $region100: #{custom-call.8} parent=87 // pred_check
                _
              $region101: #{custom-call.8} parent=87 // pred_check_branch
                %435 = sbr.rel (0) target = $region103
              $region102: #{custom-call.8} parent=87 // pred_region
                loop: start=0, step=1, limit=1
                $region104: #{custom-call.8} parent=102 // loop_pre_header
                  _
                $region105: #{custom-call.8} parent=102 // loop_header
                  %s438 = sphi 0, %s442
                  %p439 = scmp.ge.s32.totalorder %s438, 1
                  %s443 = sphi %s375, %s375
                  %s444 = sphi %s416, %s416
                $region106: #{custom-call.8} parent=102 // loop_header_branch
                  %441 = sbr.rel (%p439) target = $region110
                $region107: #{custom-call.8} parent=102 // loop_body
                  %v445 = vld [vmem:[%s443] sm:$0x3]
                  %446 = vst [vmem:[%s444] sm:$0x3] %v445
                $region108: #{custom-call.8} parent=102 // loop_footer
                  %s442 = sadd.s32 1, %s438
                $region109: #{custom-call.8} parent=102 // loop_footer_branch
                  %437 = sbr.rel target = $region105
                $region110: #{custom-call.8} parent=102 // loop_exit
                  _
              $region103: #{custom-call.8} parent=87 // pred_fallthru
                _
            $region88: #{custom-call.8} parent=83 // pred_fallthru
              _
            // Predicated region
            $region89: #{custom-call.8} parent=83 // pred_check
              _
            $region90: #{custom-call.8} parent=83 // pred_check_branch
              %422 = sbr.rel (0) target = $region92
            $region91: #{custom-call.8} parent=83 // pred_region
              loop: start=0, step=1, limit=1
              $region93: #{custom-call.8} parent=91 // loop_pre_header
                _
              $region94: #{custom-call.8} parent=91 // loop_header
                %s425 = sphi 0, %s429
                %p426 = scmp.ge.s32.totalorder %s425, 1
                %s430 = sphi %s375, %s375
                %s431 = sphi %s416, %s416
              $region95: #{custom-call.8} parent=91 // loop_header_branch
                %428 = sbr.rel (%p426) target = $region99
              $region96: #{custom-call.8} parent=91 // loop_body
                %v432 = vld [vmem:[%s430] sm:$0x3]
                %433 = vst [vmem:[%s431] sm:$0x3] %v432
              $region97: #{custom-call.8} parent=91 // loop_footer
                %s429 = sadd.s32 1, %s425
              $region98: #{custom-call.8} parent=91 // loop_footer_branch
                %424 = sbr.rel target = $region94
              $region99: #{custom-call.8} parent=91 // loop_exit
                _
            $region92: #{custom-call.8} parent=83 // pred_fallthru
              _
          $region84: #{custom-call.8} parent=79 // pred_fallthru
            _
          %447 = vnop
        $region80: #{custom-call.8} parent=38 // pred_fallthru
          _
      $region39: #{custom-call.8} parent=5 // pred_fallthru
        _
      %p448 = scmp.le.s32.totalorder 2, %s9
      // Predicated region
      $region111: #{custom-call.8} parent=5 // pred_check
        %p449 = pneg %p448
      $region112: #{custom-call.8} parent=5 // pred_check_branch
        %451 = sbr.rel (%p449) target = $region114
      $region113: #{custom-call.8} parent=5 // pred_region
        %s452 = ssub.s32 %s9, 2
        %s453 = sand.u32 %s15, 1
        %s454 = sand.u32 %s15, 1
        %s455 = smul.addr %s454, 16
        %s456 = scalar_lea.vmem [#allocation1], %s455
        // Predicated region
        $region115: #{custom-call.8} parent=113 // pred_check
          %p457 = pneg %p40
        $region116: #{custom-call.8} parent=113 // pred_check_branch
          %459 = sbr.rel (%p457) target = $region118
        $region117: #{custom-call.8} parent=113 // pred_region
          %s460 = sand.u32 %s25, 1
          %s461 = scalar_lea.sflag [#allocation4], %s460
          %s462 = sand.u32 %s25, 1
          %s463 = smul.addr %s462, 2
          %s464 = scalar_lea.vmem [#allocation3], %s463
          %465 = dma.done %s461, 32
        $region118: #{custom-call.8} parent=113 // pred_fallthru
          _
        // Predicated region
        $region119: #{custom-call.8} parent=113 // pred_check
          %p466 = pneg %p68
        $region120: #{custom-call.8} parent=113 // pred_check_branch
          %468 = sbr.rel (%p466) target = $region122
        $region121: #{custom-call.8} parent=113 // pred_region
          %s469 = sand.u32 %s53, 1
          %s470 = sand.u32 %s53, 1
          %s471 = smul.addr %s470, 2
          %s472 = scalar_lea.vmem [#allocation6], %s471
        $region122: #{custom-call.8} parent=113 // pred_fallthru
          _
      $region114: #{custom-call.8} parent=5 // pred_fallthru
        _
    $region6: #{custom-call.8} parent=1 // loop_footer
      %s13 = sadd.s32 1, %s9
    $region7: #{custom-call.8} parent=1 // loop_footer_branch
      %8 = sbr.rel target = $region3
    $region8: #{custom-call.8} parent=1 // loop_exit
      _
    %473 = vsyncpa [#allocation4], 1
    %s474 = scalar_lea.sflag [#allocation4], 1
    %475 = vsyncpa %s474, 1

// kernel: custom-call.9
$region0: #{custom-call.9}
  %s0 = inlined_call_operand.vmem [shape: f32[2,1,9,9], index: 0, kind: input, shape index: {}]
  %s1 = inlined_call_operand.vmem [shape: f32[2,1,9,9], index: 1, kind: output, shape index: {}]
  $region1: #{custom-call.9} parent=0
    #allocation0 [shape = 'u8[16384]{0}', space=vmem, size = 0x4000, scoped, tag = 'operand span for operand 0']
    #allocation1 [shape = 'u8[16384]{0}', space=vmem, size = 0x4000, scoped, tag = 'operand span for operand 1']
    loop: start=0, step=1, limit=4
    $region2: #{custom-call.9} parent=1 // loop_pre_header
      _
    $region3: #{custom-call.9} parent=1 // loop_header
      %s3 = sphi 0, %s7
      %p4 = scmp.ge.s32.totalorder %s3, 4
      %s10 = sphi 0, %s36
      %s11 = sphi 0, %s32
      %s12 = sphi 0, %s28
      %s13 = sphi 0, %s24
      %s14 = sphi 0, %s10
      %s15 = sphi 0, %s11
      %s16 = sphi 0, %s12
      %s17 = sphi 0, %s13
      %s18 = sphi 0, %s14
      %s19 = sphi 0, %s15
      %s20 = sphi 0, %s16
      %s21 = sphi 0, %s17
    $region4: #{custom-call.9} parent=1 // loop_header_branch
      %6 = sbr.rel (%p4) target = $region8
    $region5: #{custom-call.9} parent=1 // loop_body
      %s8 = ssub.s32 %s3, 1
      %s9 = ssub.s32 %s3, 2
      %s22 = sadd.s32 1, %s13
      %p23 = scmp.ge.s32.totalorder %s22, 1
      %s24 = scalar_select %p23, 0, %s22
      %s25 = sadd.s32 1, %s12
      %s26 = scalar_select %p23, %s25, %s12
      %p27 = scmp.ge.s32.totalorder %s26, 1
      %s28 = scalar_select %p27, 0, %s26
      %s29 = sadd.s32 1, %s11
      %s30 = scalar_select %p27, %s29, %s11
      %p31 = scmp.ge.s32.totalorder %s30, 1
      %s32 = scalar_select %p31, 0, %s30
      %s33 = sadd.s32 1, %s10
      %s34 = scalar_select %p31, %s33, %s10
      %p35 = scmp.ge.s32.totalorder %s34, 2
      %s36 = scalar_select %p35, 0, %s34
      %p37 = scmp.le.s32.totalorder 1, %s3
      %p38 = scmp.lt.s32.totalorder %s3, 3
      %p39 = pnand %p37, %p38
      %p40 = pneg %p39
      // Predicated region
      $region9: #{custom-call.9} parent=5 // pred_check
        _
      $region10: #{custom-call.9} parent=5 // pred_check_branch
        %42 = sbr.rel (%p39) target = $region12
      $region11: #{custom-call.9} parent=5 // pred_region
        %s43 = ssub.s32 %s3, 1
      $region12: #{custom-call.9} parent=5 // pred_fallthru
        _
      %p44 = scmp.lt.s32.totalorder %s3, 2
      // Predicated region
      $region13: #{custom-call.9} parent=5 // pred_check
        %p45 = pneg %p44
      $region14: #{custom-call.9} parent=5 // pred_check_branch
        %47 = sbr.rel (%p45) target = $region16
      $region15: #{custom-call.9} parent=5 // pred_region
        %s48 = sand.u32 %s3, 1
        %s49 = sand.u32 %s3, 1
        %s50 = smul.addr %s49, 16
        %s51 = scalar_lea.vmem [#allocation0], %s50
        %s52 = sadd.s32 %s13, %s12
        %s53 = smul.addr %s11, 2
        %s54 = sadd.s32 %s52, %s53
        %s55 = smul.addr %s10, 2
        %s56 = sadd.s32 %s54, %s55
        %s57 = smul.addr %s56, 8
        %s58 = scalar_lea.vmem %s0, %s57
        // Predicated region
        $region17: #{custom-call.9} parent=15 // pred_check
          _
        $region18: #{custom-call.9} parent=15 // pred_check_branch
          %60 = sbr.rel (0) target = $region20
        $region19: #{custom-call.9} parent=15 // pred_region
          // Predicated region
          $region21: #{custom-call.9} parent=19 // pred_check
            _
          $region22: #{custom-call.9} parent=19 // pred_check_branch
            %62 = sbr.rel (0) target = $region24
          $region23: #{custom-call.9} parent=19 // pred_region
            // Predicated region
            $region36: #{custom-call.9} parent=23 // pred_check
              _
            $region37: #{custom-call.9} parent=23 // pred_check_branch
              %79 = sbr.rel (0) target = $region39
            $region38: #{custom-call.9} parent=23 // pred_region
              loop: start=0, step=1, limit=1
              $region40: #{custom-call.9} parent=38 // loop_pre_header
                _
              $region41: #{custom-call.9} parent=38 // loop_header
                %s81 = sphi 0, %s85
                %p82 = scmp.ge.s32.totalorder %s81, 1
                %s86 = sphi %s58, %s58
                %s87 = sphi %s51, %s51
              $region42: #{custom-call.9} parent=38 // loop_header_branch
                %84 = sbr.rel (%p82) target = $region46
              $region43: #{custom-call.9} parent=38 // loop_body
                %v88 = vld [vmem:[%s86] sm:$0xff]
                %89 = vst [vmem:[%s87] sm:$0xff] %v88
                %v90 = vld [vmem:[%s86 + $0x8] sm:$0xff]
                %91 = vst [vmem:[%s87 + $0x8] sm:$0xff] %v90
              $region44: #{custom-call.9} parent=38 // loop_footer
                %s85 = sadd.s32 1, %s81
              $region45: #{custom-call.9} parent=38 // loop_footer_branch
                %80 = sbr.rel target = $region41
              $region46: #{custom-call.9} parent=38 // loop_exit
                _
            $region39: #{custom-call.9} parent=23 // pred_fallthru
              _
            // Predicated region
            $region47: #{custom-call.9} parent=23 // pred_check
              _
            $region48: #{custom-call.9} parent=23 // pred_check_branch
              %93 = sbr.rel target = $region50
            $region49: #{custom-call.9} parent=23 // pred_region
              _
            $region50: #{custom-call.9} parent=23 // pred_fallthru
              _
          $region24: #{custom-call.9} parent=19 // pred_fallthru
            _
          // Predicated region
          $region25: #{custom-call.9} parent=19 // pred_check
            _
          $region26: #{custom-call.9} parent=19 // pred_check_branch
            %64 = sbr.rel target = $region28
          $region27: #{custom-call.9} parent=19 // pred_region
            loop: start=0, step=1, limit=1
            $region29: #{custom-call.9} parent=27 // loop_pre_header
              _
            $region30: #{custom-call.9} parent=27 // loop_header
              %s67 = sphi 0, %s71
              %p68 = scmp.ge.s32.totalorder %s67, 1
              %s72 = sphi %s58, %s58
              %s73 = sphi %s51, %s51
            $region31: #{custom-call.9} parent=27 // loop_header_branch
              %70 = sbr.rel (%p68) target = $region35
            $region32: #{custom-call.9} parent=27 // loop_body
              %v74 = vld [vmem:[%s72] sm:$0xff]
              %75 = vst [vmem:[%s73] sm:$0xff] %v74
              %v76 = vld [vmem:[%s72 + $0x8] sm:$0xff]
              %77 = vst [vmem:[%s73 + $0x8] sm:$0xff] %v76
            $region33: #{custom-call.9} parent=27 // loop_footer
              %s71 = sadd.s32 1, %s67
            $region34: #{custom-call.9} parent=27 // loop_footer_branch
              %66 = sbr.rel target = $region30
            $region35: #{custom-call.9} parent=27 // loop_exit
              _
          $region28: #{custom-call.9} parent=19 // pred_fallthru
            _
        $region20: #{custom-call.9} parent=15 // pred_fallthru
          _
        %94 = vnop
      $region16: #{custom-call.9} parent=5 // pred_fallthru
        _
      %p95 = scmp.le.s32.totalorder 1, %s3
      %p96 = scmp.lt.s32.totalorder %s3, 3
      %p97 = pnand %p95, %p96
      %p98 = pneg %p97
      // Predicated region
      $region51: #{custom-call.9} parent=5 // pred_check
        _
      $region52: #{custom-call.9} parent=5 // pred_check_branch
        %100 = sbr.rel (%p97) target = $region54
      $region53: #{custom-call.9} parent=5 // pred_region
        #allocation2 [shape = 'f32[9,9]{1,0}', space=vmem, size = 0x2000, scoped, tag = 'rescaled input a']
        %s101 = ssub.s32 %s3, 1
        %s102 = sand.u32 %s8, 1
        %s103 = sand.u32 %s8, 1
        %s104 = smul.addr %s103, 16
        %s105 = scalar_lea.vmem [#allocation0], %s104
        %s106 = sand.u32 %s8, 1
        %s107 = sand.u32 %s8, 1
        %s108 = smul.addr %s107, 16
        %s109 = scalar_lea.vmem [#allocation0], %s108
        %s110 = sand.u32 %s8, 1
        %s111 = sand.u32 %s8, 1
        %s112 = smul.addr %s111, 16
        %s113 = scalar_lea.vmem [#allocation1], %s112
        %v114 = vlaneseq
        %v115 = vand.u32 %v114, 127
        %vm116 = vcmp.lt.s32.totalorder %v115, 9
        %v117 = vlaneseq
        %v118 = vshrl.u32 %v117, 7
        %vm120 = vcmp.eq.s32.totalorder %v118, %v115
        %v121 = vld [vmem:[%s105] sm:$0xff]
        %v122 = vsel %vm120, %v121, 0.0
        %123 = vadd.xlane.f32.xlu0 %v122
        %v124 = vpop.xlane.xlu0 %123
        %vm125 = vcmp.le.s32.totalorder %v118, %v115
        %vm126 = vmand %vm125, %vm116
        %v127 = vsel %vm126, %v121, 0.0
        %v128 = vrcp.pop %v124
        %v129 = vmul.f32 %v127, %v128
        %130 = vst [vmem:[#allocation2] sm:$0xff] %v129
        %s131 = scalar_lea.vmem %s105, 8 [#allocation0]
        %s132 = scalar_lea.vmem [#allocation2], 8
        %v133 = vlaneseq
        %v134 = vshrl.u32 %v133, 7
        %v135 = vadd.s32 %v134, 8
        %vm136 = vcmp.eq.s32.totalorder %v135, %v115
        %v137 = vld [vmem:[%s131] sm:$0xff]
        %v138 = vsel %vm136, %v137, 0.0
        %139 = vadd.xlane.f32.xlu0 %v138
        %v140 = vpop.xlane.xlu0 %139
        %vm141 = vcmp.le.s32.totalorder %v135, %v115
        %vm142 = vmand %vm141, %vm116
        %v143 = vsel %vm142, %v137, 0.0
        %v144 = vrcp.pop %v140
        %v145 = vmul.f32 %v143, %v144
        %146 = vst [vmem:[%s132] sm:$0xff] %v145
        %v147 = vlaneseq
        %v148 = vand.u32 %v147, 127
        %v149 = vlaneseq
        %v150 = vshrl.u32 %v149, 7
        %vm152 = vcmp.eq.s32.totalorder %v148, %v150
        %v153 = vsel %vm152, -1.0, 0.0
        %v154 = vlaneseq
        %v155 = vand.u32 %v154, 127
        %v156 = vlaneseq
        %v157 = vshrl.u32 %v156, 7
        %v158 = vadd.s32 %v157, 8
        %vm159 = vcmp.eq.s32.totalorder %v155, %v158
        %v160 = vlaneseq
        %v161 = vand.u32 %v160, 127
        %vm162 = vcmp.eq.s32.totalorder %v161, 8
        %v163 = vsel %vm162, 1.0, -1.0
        %v164 = vsel %vm159, %v163, 0.0
        %s165 = scalar_lea.vmem [#allocation2], 7
        %v166 = vld [vmem:[%s165] ss:$0 sm:$0xff]
        %v167 = vxor.u32 %v166, 2147483648
        %v168 = vlaneseq
        %v169 = vand.u32 %v168, 127
        %vm170 = vcmp.eq.s32.totalorder %v169, 7
        %v171 = vmul.f32 %v167, %v153
        %172 = vadd.xlane.f32.xlu0 %v171
        %v173 = vpop.xlane.xlu0 %172
        %v174 = vsel %vm170, %v173, %v153
        %v175 = vmul.f32 %v167, %v164
        %176 = vadd.xlane.f32.xlu0 %v175
        %v177 = vpop.xlane.xlu0 %176
        %v178 = vsel %vm170, %v177, %v164
        %s179 = scalar_lea.vmem [#allocation2], 6
        %v180 = vld [vmem:[%s179] ss:$0 sm:$0xff]
        %v181 = vxor.u32 %v180, 2147483648
        %v182 = vlaneseq
        %v183 = vand.u32 %v182, 127
        %vm184 = vcmp.eq.s32.totalorder %v183, 6
        %v185 = vmul.f32 %v181, %v174
        %186 = vadd.xlane.f32.xlu0 %v185
        %v187 = vpop.xlane.xlu0 %186
        %v188 = vsel %vm184, %v187, %v174
        %v189 = vmul.f32 %v181, %v178
        %190 = vadd.xlane.f32.xlu0 %v189
        %v191 = vpop.xlane.xlu0 %190
        %v192 = vsel %vm184, %v191, %v178
        %s193 = scalar_lea.vmem [#allocation2], 5
        %v194 = vld [vmem:[%s193] ss:$0 sm:$0xff]
        %v195 = vxor.u32 %v194, 2147483648
        %v196 = vlaneseq
        %v197 = vand.u32 %v196, 127
        %vm198 = vcmp.eq.s32.totalorder %v197, 5
        %v199 = vmul.f32 %v195, %v188
        %200 = vadd.xlane.f32.xlu0 %v199
        %v201 = vpop.xlane.xlu0 %200
        %v202 = vsel %vm198, %v201, %v188
        %v203 = vmul.f32 %v195, %v192
        %204 = vadd.xlane.f32.xlu0 %v203
        %v205 = vpop.xlane.xlu0 %204
        %v206 = vsel %vm198, %v205, %v192
        %s207 = scalar_lea.vmem [#allocation2], 4
        %v208 = vld [vmem:[%s207] ss:$0 sm:$0xff]
        %v209 = vxor.u32 %v208, 2147483648
        %v210 = vlaneseq
        %v211 = vand.u32 %v210, 127
        %vm212 = vcmp.eq.s32.totalorder %v211, 4
        %v213 = vmul.f32 %v209, %v202
        %214 = vadd.xlane.f32.xlu0 %v213
        %v215 = vpop.xlane.xlu0 %214
        %v216 = vsel %vm212, %v215, %v202
        %v217 = vmul.f32 %v209, %v206
        %218 = vadd.xlane.f32.xlu0 %v217
        %v219 = vpop.xlane.xlu0 %218
        %v220 = vsel %vm212, %v219, %v206
        %s221 = scalar_lea.vmem [#allocation2], 3
        %v222 = vld [vmem:[%s221] ss:$0 sm:$0xff]
        %v223 = vxor.u32 %v222, 2147483648
        %v224 = vlaneseq
        %v225 = vand.u32 %v224, 127
        %vm226 = vcmp.eq.s32.totalorder %v225, 3
        %v227 = vmul.f32 %v223, %v216
        %228 = vadd.xlane.f32.xlu0 %v227
        %v229 = vpop.xlane.xlu0 %228
        %v230 = vsel %vm226, %v229, %v216
        %v231 = vmul.f32 %v223, %v220
        %232 = vadd.xlane.f32.xlu0 %v231
        %v233 = vpop.xlane.xlu0 %232
        %v234 = vsel %vm226, %v233, %v220
        %s235 = scalar_lea.vmem [#allocation2], 2
        %v236 = vld [vmem:[%s235] ss:$0 sm:$0xff]
        %v237 = vxor.u32 %v236, 2147483648
        %v238 = vlaneseq
        %v239 = vand.u32 %v238, 127
        %vm240 = vcmp.eq.s32.totalorder %v239, 2
        %v241 = vmul.f32 %v237, %v230
        %242 = vadd.xlane.f32.xlu0 %v241
        %v243 = vpop.xlane.xlu0 %242
        %v244 = vsel %vm240, %v243, %v230
        %v245 = vmul.f32 %v237, %v234
        %246 = vadd.xlane.f32.xlu0 %v245
        %v247 = vpop.xlane.xlu0 %246
        %v248 = vsel %vm240, %v247, %v234
        %s249 = scalar_lea.vmem [#allocation2], 1
        %v250 = vld [vmem:[%s249] ss:$0 sm:$0xff]
        %v251 = vxor.u32 %v250, 2147483648
        %v252 = vlaneseq
        %v253 = vand.u32 %v252, 127
        %vm254 = vcmp.eq.s32.totalorder %v253, 1
        %v255 = vmul.f32 %v251, %v244
        %256 = vadd.xlane.f32.xlu0 %v255
        %v257 = vpop.xlane.xlu0 %256
        %v258 = vsel %vm254, %v257, %v244
        %v259 = vmul.f32 %v251, %v248
        %260 = vadd.xlane.f32.xlu0 %v259
        %v261 = vpop.xlane.xlu0 %260
        %v262 = vsel %vm254, %v261, %v248
        %v263 = vld [vmem:[#allocation2] ss:$0 sm:$0xff]
        %v264 = vxor.u32 %v263, 2147483648
        %v265 = vlaneseq
        %v266 = vand.u32 %v265, 127
        %vm267 = vcmp.eq.s32.totalorder %v266, 0
        %v268 = vmul.f32 %v264, %v258
        %269 = vadd.xlane.f32.xlu0 %v268
        %v270 = vpop.xlane.xlu0 %269
        %v271 = vsel %vm267, %v270, %v258
        %v272 = vmul.f32 %v264, %v262
        %273 = vadd.xlane.f32.xlu0 %v272
        %v274 = vpop.xlane.xlu0 %273
        %v275 = vsel %vm267, %v274, %v262
        %v276 = vrcp.pop %v124
        %v277 = vmul.f32 %v271, %v276
        %vm278 = vweird.f32 %v124
        %v279 = vsel %vm278, %v271, %v277
        %280 = vst [vmem:[%s113] sm:$0xff] %v279
        %v281 = vrcp.pop %v140
        %v282 = vmul.f32 %v275, %v281
        %vm283 = vweird.f32 %v140
        %v284 = vsel %vm283, %v275, %v282
        %s285 = scalar_lea.vmem %s113, 8 [#allocation1]
        %286 = vst [vmem:[%s285] sm:$0xff] %v284
        %s287 = sand.u32 %s8, 1
        %s288 = sand.u32 %s8, 1
        %s289 = smul.addr %s288, 16
        %s290 = scalar_lea.vmem [#allocation1], %s289
        %s291 = sadd.s32 %s17, %s16
        %s292 = smul.addr %s15, 2
        %s293 = sadd.s32 %s291, %s292
        %s294 = smul.addr %s14, 2
        %s295 = sadd.s32 %s293, %s294
        %s296 = smul.addr %s295, 8
        %s297 = scalar_lea.vmem %s1, %s296
        // Predicated region
        $region55: #{custom-call.9} parent=53 // pred_check
          _
        $region56: #{custom-call.9} parent=53 // pred_check_branch
          %299 = sbr.rel (0) target = $region58
        $region57: #{custom-call.9} parent=53 // pred_region
          // Predicated region
          $region59: #{custom-call.9} parent=57 // pred_check
            _
          $region60: #{custom-call.9} parent=57 // pred_check_branch
            %301 = sbr.rel (0) target = $region62
          $region61: #{custom-call.9} parent=57 // pred_region
            // Predicated region
            $region74: #{custom-call.9} parent=61 // pred_check
              _
            $region75: #{custom-call.9} parent=61 // pred_check_branch
              %318 = sbr.rel (0) target = $region77
            $region76: #{custom-call.9} parent=61 // pred_region
              loop: start=0, step=1, limit=1
              $region78: #{custom-call.9} parent=76 // loop_pre_header
                _
              $region79: #{custom-call.9} parent=76 // loop_header
                %s320 = sphi 0, %s324
                %p321 = scmp.ge.s32.totalorder %s320, 1
                %s325 = sphi %s290, %s290
                %s326 = sphi %s297, %s297
              $region80: #{custom-call.9} parent=76 // loop_header_branch
                %323 = sbr.rel (%p321) target = $region84
              $region81: #{custom-call.9} parent=76 // loop_body
                %v327 = vld [vmem:[%s325] sm:$0xff]
                %328 = vst [vmem:[%s326] sm:$0xff] %v327
                %v329 = vld [vmem:[%s325 + $0x8] sm:$0xff]
                %330 = vst [vmem:[%s326 + $0x8] sm:$0xff] %v329
              $region82: #{custom-call.9} parent=76 // loop_footer
                %s324 = sadd.s32 1, %s320
              $region83: #{custom-call.9} parent=76 // loop_footer_branch
                %319 = sbr.rel target = $region79
              $region84: #{custom-call.9} parent=76 // loop_exit
                _
            $region77: #{custom-call.9} parent=61 // pred_fallthru
              _
            // Predicated region
            $region85: #{custom-call.9} parent=61 // pred_check
              _
            $region86: #{custom-call.9} parent=61 // pred_check_branch
              %332 = sbr.rel target = $region88
            $region87: #{custom-call.9} parent=61 // pred_region
              _
            $region88: #{custom-call.9} parent=61 // pred_fallthru
              _
          $region62: #{custom-call.9} parent=57 // pred_fallthru
            _
          // Predicated region
          $region63: #{custom-call.9} parent=57 // pred_check
            _
          $region64: #{custom-call.9} parent=57 // pred_check_branch
            %303 = sbr.rel target = $region66
          $region65: #{custom-call.9} parent=57 // pred_region
            loop: start=0, step=1, limit=1
            $region67: #{custom-call.9} parent=65 // loop_pre_header
              _
            $region68: #{custom-call.9} parent=65 // loop_header
              %s306 = sphi 0, %s310
              %p307 = scmp.ge.s32.totalorder %s306, 1
              %s311 = sphi %s290, %s290
              %s312 = sphi %s297, %s297
            $region69: #{custom-call.9} parent=65 // loop_header_branch
              %309 = sbr.rel (%p307) target = $region73
            $region70: #{custom-call.9} parent=65 // loop_body
              %v313 = vld [vmem:[%s311] sm:$0xff]
              %314 = vst [vmem:[%s312] sm:$0xff] %v313
              %v315 = vld [vmem:[%s311 + $0x8] sm:$0xff]
              %316 = vst [vmem:[%s312 + $0x8] sm:$0xff] %v315
            $region71: #{custom-call.9} parent=65 // loop_footer
              %s310 = sadd.s32 1, %s306
            $region72: #{custom-call.9} parent=65 // loop_footer_branch
              %305 = sbr.rel target = $region68
            $region73: #{custom-call.9} parent=65 // loop_exit
              _
          $region66: #{custom-call.9} parent=57 // pred_fallthru
            _
        $region58: #{custom-call.9} parent=53 // pred_fallthru
          _
        %333 = vnop
      $region54: #{custom-call.9} parent=5 // pred_fallthru
        _
      %p334 = scmp.le.s32.totalorder 2, %s3
      // Predicated region
      $region89: #{custom-call.9} parent=5 // pred_check
        %p335 = pneg %p334
      $region90: #{custom-call.9} parent=5 // pred_check_branch
        %337 = sbr.rel (%p335) target = $region92
      $region91: #{custom-call.9} parent=5 // pred_region
        %s338 = ssub.s32 %s3, 2
        %s339 = sand.u32 %s9, 1
        %s340 = sand.u32 %s9, 1
        %s341 = smul.addr %s340, 16
        %s342 = scalar_lea.vmem [#allocation1], %s341
      $region92: #{custom-call.9} parent=5 // pred_fallthru
        _
    $region6: #{custom-call.9} parent=1 // loop_footer
      %s7 = sadd.s32 1, %s3
    $region7: #{custom-call.9} parent=1 // loop_footer_branch
      %2 = sbr.rel target = $region3
    $region8: #{custom-call.9} parent=1 // loop_exit
      _

// kernel: custom-call.10
$region0: #{custom-call.10}
  %s0 = inlined_call_operand.vmem [shape: f32[2,1,9,9], index: 0, kind: input, shape index: {}]
  %s1 = inlined_call_operand.vmem [shape: f32[2,1,9,9], index: 1, kind: output, shape index: {}]
  $region1: #{custom-call.10} parent=0
    #allocation0 [shape = 'u8[16384]{0}', space=vmem, size = 0x4000, scoped, tag = 'operand span for operand 0']
    #allocation1 [shape = 'u8[16384]{0}', space=vmem, size = 0x4000, scoped, tag = 'operand span for operand 1']
    loop: start=0, step=1, limit=4
    $region2: #{custom-call.10} parent=1 // loop_pre_header
      _
    $region3: #{custom-call.10} parent=1 // loop_header
      %s3 = sphi 0, %s7
      %p4 = scmp.ge.s32.totalorder %s3, 4
      %s10 = sphi 0, %s36
      %s11 = sphi 0, %s32
      %s12 = sphi 0, %s28
      %s13 = sphi 0, %s24
      %s14 = sphi 0, %s10
      %s15 = sphi 0, %s11
      %s16 = sphi 0, %s12
      %s17 = sphi 0, %s13
      %s18 = sphi 0, %s14
      %s19 = sphi 0, %s15
      %s20 = sphi 0, %s16
      %s21 = sphi 0, %s17
    $region4: #{custom-call.10} parent=1 // loop_header_branch
      %6 = sbr.rel (%p4) target = $region8
    $region5: #{custom-call.10} parent=1 // loop_body
      %s8 = ssub.s32 %s3, 1
      %s9 = ssub.s32 %s3, 2
      %s22 = sadd.s32 1, %s13
      %p23 = scmp.ge.s32.totalorder %s22, 1
      %s24 = scalar_select %p23, 0, %s22
      %s25 = sadd.s32 1, %s12
      %s26 = scalar_select %p23, %s25, %s12
      %p27 = scmp.ge.s32.totalorder %s26, 1
      %s28 = scalar_select %p27, 0, %s26
      %s29 = sadd.s32 1, %s11
      %s30 = scalar_select %p27, %s29, %s11
      %p31 = scmp.ge.s32.totalorder %s30, 1
      %s32 = scalar_select %p31, 0, %s30
      %s33 = sadd.s32 1, %s10
      %s34 = scalar_select %p31, %s33, %s10
      %p35 = scmp.ge.s32.totalorder %s34, 2
      %s36 = scalar_select %p35, 0, %s34
      %p37 = scmp.le.s32.totalorder 1, %s3
      %p38 = scmp.lt.s32.totalorder %s3, 3
      %p39 = pnand %p37, %p38
      %p40 = pneg %p39
      // Predicated region
      $region9: #{custom-call.10} parent=5 // pred_check
        _
      $region10: #{custom-call.10} parent=5 // pred_check_branch
        %42 = sbr.rel (%p39) target = $region12
      $region11: #{custom-call.10} parent=5 // pred_region
        %s43 = ssub.s32 %s3, 1
      $region12: #{custom-call.10} parent=5 // pred_fallthru
        _
      %p44 = scmp.lt.s32.totalorder %s3, 2
      // Predicated region
      $region13: #{custom-call.10} parent=5 // pred_check
        %p45 = pneg %p44
      $region14: #{custom-call.10} parent=5 // pred_check_branch
        %47 = sbr.rel (%p45) target = $region16
      $region15: #{custom-call.10} parent=5 // pred_region
        %s48 = sand.u32 %s3, 1
        %s49 = sand.u32 %s3, 1
        %s50 = smul.addr %s49, 16
        %s51 = scalar_lea.vmem [#allocation0], %s50
        %s52 = sadd.s32 %s13, %s12
        %s53 = smul.addr %s11, 2
        %s54 = sadd.s32 %s52, %s53
        %s55 = smul.addr %s10, 2
        %s56 = sadd.s32 %s54, %s55
        %s57 = smul.addr %s56, 8
        %s58 = scalar_lea.vmem %s0, %s57
        // Predicated region
        $region17: #{custom-call.10} parent=15 // pred_check
          _
        $region18: #{custom-call.10} parent=15 // pred_check_branch
          %60 = sbr.rel (0) target = $region20
        $region19: #{custom-call.10} parent=15 // pred_region
          // Predicated region
          $region21: #{custom-call.10} parent=19 // pred_check
            _
          $region22: #{custom-call.10} parent=19 // pred_check_branch
            %62 = sbr.rel (0) target = $region24
          $region23: #{custom-call.10} parent=19 // pred_region
            // Predicated region
            $region36: #{custom-call.10} parent=23 // pred_check
              _
            $region37: #{custom-call.10} parent=23 // pred_check_branch
              %79 = sbr.rel (0) target = $region39
            $region38: #{custom-call.10} parent=23 // pred_region
              loop: start=0, step=1, limit=1
              $region40: #{custom-call.10} parent=38 // loop_pre_header
                _
              $region41: #{custom-call.10} parent=38 // loop_header
                %s81 = sphi 0, %s85
                %p82 = scmp.ge.s32.totalorder %s81, 1
                %s86 = sphi %s58, %s58
                %s87 = sphi %s51, %s51
              $region42: #{custom-call.10} parent=38 // loop_header_branch
                %84 = sbr.rel (%p82) target = $region46
              $region43: #{custom-call.10} parent=38 // loop_body
                %v88 = vld [vmem:[%s86] sm:$0xff]
                %89 = vst [vmem:[%s87] sm:$0xff] %v88
                %v90 = vld [vmem:[%s86 + $0x8] sm:$0xff]
                %91 = vst [vmem:[%s87 + $0x8] sm:$0xff] %v90
              $region44: #{custom-call.10} parent=38 // loop_footer
                %s85 = sadd.s32 1, %s81
              $region45: #{custom-call.10} parent=38 // loop_footer_branch
                %80 = sbr.rel target = $region41
              $region46: #{custom-call.10} parent=38 // loop_exit
                _
            $region39: #{custom-call.10} parent=23 // pred_fallthru
              _
            // Predicated region
            $region47: #{custom-call.10} parent=23 // pred_check
              _
            $region48: #{custom-call.10} parent=23 // pred_check_branch
              %93 = sbr.rel target = $region50
            $region49: #{custom-call.10} parent=23 // pred_region
              _
            $region50: #{custom-call.10} parent=23 // pred_fallthru
              _
          $region24: #{custom-call.10} parent=19 // pred_fallthru
            _
          // Predicated region
          $region25: #{custom-call.10} parent=19 // pred_check
            _
          $region26: #{custom-call.10} parent=19 // pred_check_branch
            %64 = sbr.rel target = $region28
          $region27: #{custom-call.10} parent=19 // pred_region
            loop: start=0, step=1, limit=1
            $region29: #{custom-call.10} parent=27 // loop_pre_header
              _
            $region30: #{custom-call.10} parent=27 // loop_header
              %s67 = sphi 0, %s71
              %p68 = scmp.ge.s32.totalorder %s67, 1
              %s72 = sphi %s58, %s58
              %s73 = sphi %s51, %s51
            $region31: #{custom-call.10} parent=27 // loop_header_branch
              %70 = sbr.rel (%p68) target = $region35
            $region32: #{custom-call.10} parent=27 // loop_body
              %v74 = vld [vmem:[%s72] sm:$0xff]
              %75 = vst [vmem:[%s73] sm:$0xff] %v74
              %v76 = vld [vmem:[%s72 + $0x8] sm:$0xff]
              %77 = vst [vmem:[%s73 + $0x8] sm:$0xff] %v76
            $region33: #{custom-call.10} parent=27 // loop_footer
              %s71 = sadd.s32 1, %s67
            $region34: #{custom-call.10} parent=27 // loop_footer_branch
              %66 = sbr.rel target = $region30
            $region35: #{custom-call.10} parent=27 // loop_exit
              _
          $region28: #{custom-call.10} parent=19 // pred_fallthru
            _
        $region20: #{custom-call.10} parent=15 // pred_fallthru
          _
        %94 = vnop
      $region16: #{custom-call.10} parent=5 // pred_fallthru
        _
      %p95 = scmp.le.s32.totalorder 1, %s3
      %p96 = scmp.lt.s32.totalorder %s3, 3
      %p97 = pnand %p95, %p96
      %p98 = pneg %p97
      // Predicated region
      $region51: #{custom-call.10} parent=5 // pred_check
        _
      $region52: #{custom-call.10} parent=5 // pred_check_branch
        %100 = sbr.rel (%p97) target = $region54
      $region53: #{custom-call.10} parent=5 // pred_region
        #allocation2 [shape = 'f32[9,9]{1,0}', space=vmem, size = 0x2000, scoped, tag = 'rescaled input a']
        %s101 = ssub.s32 %s3, 1
        %s102 = sand.u32 %s8, 1
        %s103 = sand.u32 %s8, 1
        %s104 = smul.addr %s103, 16
        %s105 = scalar_lea.vmem [#allocation0], %s104
        %s106 = sand.u32 %s8, 1
        %s107 = sand.u32 %s8, 1
        %s108 = smul.addr %s107, 16
        %s109 = scalar_lea.vmem [#allocation0], %s108
        %s110 = sand.u32 %s8, 1
        %s111 = sand.u32 %s8, 1
        %s112 = smul.addr %s111, 16
        %s113 = scalar_lea.vmem [#allocation1], %s112
        %v114 = vlaneseq
        %v115 = vand.u32 %v114, 127
        %vm116 = vcmp.lt.s32.totalorder %v115, 9
        %v117 = vlaneseq
        %v118 = vshrl.u32 %v117, 7
        %vm120 = vcmp.eq.s32.totalorder %v118, %v115
        %v121 = vld [vmem:[%s105] sm:$0xff]
        %v122 = vsel %vm120, %v121, 0.0
        %123 = vadd.xlane.f32.xlu0 %v122
        %v124 = vpop.xlane.xlu0 %123
        %vm125 = vcmp.ge.s32.totalorder %v118, %v115
        %vm126 = vmand %vm125, %vm116
        %v127 = vsel %vm126, %v121, 0.0
        %v128 = vrcp.pop %v124
        %v129 = vmul.f32 %v127, %v128
        %130 = vst [vmem:[#allocation2] sm:$0xff] %v129
        %s131 = scalar_lea.vmem %s105, 8 [#allocation0]
        %s132 = scalar_lea.vmem [#allocation2], 8
        %v133 = vlaneseq
        %v134 = vshrl.u32 %v133, 7
        %v135 = vadd.s32 %v134, 8
        %vm136 = vcmp.eq.s32.totalorder %v135, %v115
        %v137 = vld [vmem:[%s131] sm:$0xff]
        %v138 = vsel %vm136, %v137, 0.0
        %139 = vadd.xlane.f32.xlu0 %v138
        %v140 = vpop.xlane.xlu0 %139
        %vm141 = vcmp.ge.s32.totalorder %v135, %v115
        %vm142 = vmand %vm141, %vm116
        %v143 = vsel %vm142, %v137, 0.0
        %v144 = vrcp.pop %v140
        %v145 = vmul.f32 %v143, %v144
        %146 = vst [vmem:[%s132] sm:$0xff] %v145
        %v147 = vlaneseq
        %v148 = vand.u32 %v147, 127
        %v149 = vlaneseq
        %v150 = vshrl.u32 %v149, 7
        %vm152 = vcmp.eq.s32.totalorder %v148, %v150
        %v153 = vlaneseq
        %v154 = vand.u32 %v153, 127
        %vm155 = vcmp.eq.s32.totalorder %v154, 0
        %v156 = vsel %vm155, 1.0, -1.0
        %v157 = vsel %vm152, %v156, 0.0
        %v158 = vlaneseq
        %v159 = vand.u32 %v158, 127
        %v160 = vlaneseq
        %v161 = vshrl.u32 %v160, 7
        %v162 = vadd.s32 %v161, 8
        %vm163 = vcmp.eq.s32.totalorder %v159, %v162
        %v164 = vsel %vm163, -1.0, 0.0
        %s165 = scalar_lea.vmem [#allocation2], 1
        %v166 = vld [vmem:[%s165] ss:$0 sm:$0xff]
        %v167 = vxor.u32 %v166, 2147483648
        %v168 = vlaneseq
        %v169 = vand.u32 %v168, 127
        %vm170 = vcmp.eq.s32.totalorder %v169, 1
        %v171 = vmul.f32 %v167, %v157
        %172 = vadd.xlane.f32.xlu0 %v171
        %v173 = vpop.xlane.xlu0 %172
        %v174 = vsel %vm170, %v173, %v157
        %s175 = scalar_lea.vmem [#allocation2], 2
        %v176 = vld [vmem:[%s175] ss:$0 sm:$0xff]
        %v177 = vxor.u32 %v176, 2147483648
        %v178 = vlaneseq
        %v179 = vand.u32 %v178, 127
        %vm180 = vcmp.eq.s32.totalorder %v179, 2
        %v181 = vmul.f32 %v177, %v174
        %182 = vadd.xlane.f32.xlu0 %v181
        %v183 = vpop.xlane.xlu0 %182
        %v184 = vsel %vm180, %v183, %v174
        %s185 = scalar_lea.vmem [#allocation2], 3
        %v186 = vld [vmem:[%s185] ss:$0 sm:$0xff]
        %v187 = vxor.u32 %v186, 2147483648
        %v188 = vlaneseq
        %v189 = vand.u32 %v188, 127
        %vm190 = vcmp.eq.s32.totalorder %v189, 3
        %v191 = vmul.f32 %v187, %v184
        %192 = vadd.xlane.f32.xlu0 %v191
        %v193 = vpop.xlane.xlu0 %192
        %v194 = vsel %vm190, %v193, %v184
        %s195 = scalar_lea.vmem [#allocation2], 4
        %v196 = vld [vmem:[%s195] ss:$0 sm:$0xff]
        %v197 = vxor.u32 %v196, 2147483648
        %v198 = vlaneseq
        %v199 = vand.u32 %v198, 127
        %vm200 = vcmp.eq.s32.totalorder %v199, 4
        %v201 = vmul.f32 %v197, %v194
        %202 = vadd.xlane.f32.xlu0 %v201
        %v203 = vpop.xlane.xlu0 %202
        %v204 = vsel %vm200, %v203, %v194
        %s205 = scalar_lea.vmem [#allocation2], 5
        %v206 = vld [vmem:[%s205] ss:$0 sm:$0xff]
        %v207 = vxor.u32 %v206, 2147483648
        %v208 = vlaneseq
        %v209 = vand.u32 %v208, 127
        %vm210 = vcmp.eq.s32.totalorder %v209, 5
        %v211 = vmul.f32 %v207, %v204
        %212 = vadd.xlane.f32.xlu0 %v211
        %v213 = vpop.xlane.xlu0 %212
        %v214 = vsel %vm210, %v213, %v204
        %s215 = scalar_lea.vmem [#allocation2], 6
        %v216 = vld [vmem:[%s215] ss:$0 sm:$0xff]
        %v217 = vxor.u32 %v216, 2147483648
        %v218 = vlaneseq
        %v219 = vand.u32 %v218, 127
        %vm220 = vcmp.eq.s32.totalorder %v219, 6
        %v221 = vmul.f32 %v217, %v214
        %222 = vadd.xlane.f32.xlu0 %v221
        %v223 = vpop.xlane.xlu0 %222
        %v224 = vsel %vm220, %v223, %v214
        %s225 = scalar_lea.vmem [#allocation2], 7
        %v226 = vld [vmem:[%s225] ss:$0 sm:$0xff]
        %v227 = vxor.u32 %v226, 2147483648
        %v228 = vlaneseq
        %v229 = vand.u32 %v228, 127
        %vm230 = vcmp.eq.s32.totalorder %v229, 7
        %v231 = vmul.f32 %v227, %v224
        %232 = vadd.xlane.f32.xlu0 %v231
        %v233 = vpop.xlane.xlu0 %232
        %v234 = vsel %vm230, %v233, %v224
        %s235 = scalar_lea.vmem [#allocation2], 8
        %v236 = vld [vmem:[%s235] ss:$0 sm:$0xff]
        %v237 = vxor.u32 %v236, 2147483648
        %v238 = vlaneseq
        %v239 = vand.u32 %v238, 127
        %vm240 = vcmp.eq.s32.totalorder %v239, 8
        %v241 = vmul.f32 %v237, %v234
        %242 = vadd.xlane.f32.xlu0 %v241
        %v243 = vpop.xlane.xlu0 %242
        %v244 = vsel %vm240, %v243, %v234
        %v245 = vmul.f32 %v237, %v164
        %246 = vadd.xlane.f32.xlu0 %v245
        %v247 = vpop.xlane.xlu0 %246
        %v248 = vsel %vm240, %v247, %v164
        %v249 = vrcp.pop %v124
        %v250 = vmul.f32 %v244, %v249
        %vm251 = vweird.f32 %v124
        %v252 = vsel %vm251, %v244, %v250
        %253 = vst [vmem:[%s113] sm:$0xff] %v252
        %v254 = vrcp.pop %v140
        %v255 = vmul.f32 %v248, %v254
        %vm256 = vweird.f32 %v140
        %v257 = vsel %vm256, %v248, %v255
        %s258 = scalar_lea.vmem %s113, 8 [#allocation1]
        %259 = vst [vmem:[%s258] sm:$0xff] %v257
        %s260 = sand.u32 %s8, 1
        %s261 = sand.u32 %s8, 1
        %s262 = smul.addr %s261, 16
        %s263 = scalar_lea.vmem [#allocation1], %s262
        %s264 = sadd.s32 %s17, %s16
        %s265 = smul.addr %s15, 2
        %s266 = sadd.s32 %s264, %s265
        %s267 = smul.addr %s14, 2
        %s268 = sadd.s32 %s266, %s267
        %s269 = smul.addr %s268, 8
        %s270 = scalar_lea.vmem %s1, %s269
        // Predicated region
        $region55: #{custom-call.10} parent=53 // pred_check
          _
        $region56: #{custom-call.10} parent=53 // pred_check_branch
          %272 = sbr.rel (0) target = $region58
        $region57: #{custom-call.10} parent=53 // pred_region
          // Predicated region
          $region59: #{custom-call.10} parent=57 // pred_check
            _
          $region60: #{custom-call.10} parent=57 // pred_check_branch
            %274 = sbr.rel (0) target = $region62
          $region61: #{custom-call.10} parent=57 // pred_region
            // Predicated region
            $region74: #{custom-call.10} parent=61 // pred_check
              _
            $region75: #{custom-call.10} parent=61 // pred_check_branch
              %291 = sbr.rel (0) target = $region77
            $region76: #{custom-call.10} parent=61 // pred_region
              loop: start=0, step=1, limit=1
              $region78: #{custom-call.10} parent=76 // loop_pre_header
                _
              $region79: #{custom-call.10} parent=76 // loop_header
                %s293 = sphi 0, %s297
                %p294 = scmp.ge.s32.totalorder %s293, 1
                %s298 = sphi %s263, %s263
                %s299 = sphi %s270, %s270
              $region80: #{custom-call.10} parent=76 // loop_header_branch
                %296 = sbr.rel (%p294) target = $region84
              $region81: #{custom-call.10} parent=76 // loop_body
                %v300 = vld [vmem:[%s298] sm:$0xff]
                %301 = vst [vmem:[%s299] sm:$0xff] %v300
                %v302 = vld [vmem:[%s298 + $0x8] sm:$0xff]
                %303 = vst [vmem:[%s299 + $0x8] sm:$0xff] %v302
              $region82: #{custom-call.10} parent=76 // loop_footer
                %s297 = sadd.s32 1, %s293
              $region83: #{custom-call.10} parent=76 // loop_footer_branch
                %292 = sbr.rel target = $region79
              $region84: #{custom-call.10} parent=76 // loop_exit
                _
            $region77: #{custom-call.10} parent=61 // pred_fallthru
              _
            // Predicated region
            $region85: #{custom-call.10} parent=61 // pred_check
              _
            $region86: #{custom-call.10} parent=61 // pred_check_branch
              %305 = sbr.rel target = $region88
            $region87: #{custom-call.10} parent=61 // pred_region
              _
            $region88: #{custom-call.10} parent=61 // pred_fallthru
              _
          $region62: #{custom-call.10} parent=57 // pred_fallthru
            _
          // Predicated region
          $region63: #{custom-call.10} parent=57 // pred_check
            _
          $region64: #{custom-call.10} parent=57 // pred_check_branch
            %276 = sbr.rel target = $region66
          $region65: #{custom-call.10} parent=57 // pred_region
            loop: start=0, step=1, limit=1
            $region67: #{custom-call.10} parent=65 // loop_pre_header
              _
            $region68: #{custom-call.10} parent=65 // loop_header
              %s279 = sphi 0, %s283
              %p280 = scmp.ge.s32.totalorder %s279, 1
              %s284 = sphi %s263, %s263
              %s285 = sphi %s270, %s270
            $region69: #{custom-call.10} parent=65 // loop_header_branch
              %282 = sbr.rel (%p280) target = $region73
            $region70: #{custom-call.10} parent=65 // loop_body
              %v286 = vld [vmem:[%s284] sm:$0xff]
              %287 = vst [vmem:[%s285] sm:$0xff] %v286
              %v288 = vld [vmem:[%s284 + $0x8] sm:$0xff]
              %289 = vst [vmem:[%s285 + $0x8] sm:$0xff] %v288
            $region71: #{custom-call.10} parent=65 // loop_footer
              %s283 = sadd.s32 1, %s279
            $region72: #{custom-call.10} parent=65 // loop_footer_branch
              %278 = sbr.rel target = $region68
            $region73: #{custom-call.10} parent=65 // loop_exit
              _
          $region66: #{custom-call.10} parent=57 // pred_fallthru
            _
        $region58: #{custom-call.10} parent=53 // pred_fallthru
          _
        %306 = vnop
      $region54: #{custom-call.10} parent=5 // pred_fallthru
        _
      %p307 = scmp.le.s32.totalorder 2, %s3
      // Predicated region
      $region89: #{custom-call.10} parent=5 // pred_check
        %p308 = pneg %p307
      $region90: #{custom-call.10} parent=5 // pred_check_branch
        %310 = sbr.rel (%p308) target = $region92
      $region91: #{custom-call.10} parent=5 // pred_region
        %s311 = ssub.s32 %s3, 2
        %s312 = sand.u32 %s9, 1
        %s313 = sand.u32 %s9, 1
        %s314 = smul.addr %s313, 16
        %s315 = scalar_lea.vmem [#allocation1], %s314
      $region92: #{custom-call.10} parent=5 // pred_fallthru
        _
    $region6: #{custom-call.10} parent=1 // loop_footer
      %s7 = sadd.s32 1, %s3
    $region7: #{custom-call.10} parent=1 // loop_footer_branch
      %2 = sbr.rel target = $region3
    $region8: #{custom-call.10} parent=1 // loop_exit
      _

// kernel: estimate_light.1
$region0: #{estimate_light.1}
  #allocation0 [shape = 'u32[]', space=smem, size = 0x4, offset = 0x4, fixed_abs, tag = 'smem constant byte address 0x4 - core index']
  #allocation1 [shape = 'u32[144,128]{1,0:T(1,128)}', space=vmem, size = 0x12000, scoped, tag = 'internal scratch']
  %s0 = inlined_call_operand.hbm [shape: f32[2,3,16,16], index: 0, kind: input, shape index: {}]
  %s1 = inlined_call_operand.vmem [shape: f32[2,1,16,16], index: 1, kind: input, shape index: {}, may-alias: {1,2,3}]
  %s2 = inlined_call_operand.vmem [shape: f32[2,1,16,16], index: 2, kind: input, shape index: {}, may-alias: {1,2,3}]
  %s3 = inlined_call_operand.vmem [shape: f32[2,1,16,16], index: 3, kind: input, shape index: {}, may-alias: {1,2,3}]
  %s4 = inlined_call_operand.hbm [shape: f32[2,3,16,16], index: 4, kind: input, shape index: {}]
  %s5 = inlined_call_operand.vmem [shape: f32[2,1,12,12], index: 5, kind: output, shape index: {}]
  %s6 = sld [smem:[#allocation0]]
  $region61: #{estimate_light.1} parent=0
    _
  %s8 = ssub.s32 1, %s6
  %s9 = scalar_select 0, %s8, %s6
  $region1: #{estimate_light.1} parent=0
    #allocation2 [shape = 'u8[49152]{0}', space=vmem, size = 0xc000, scoped, tag = 'input window, operand 0']
    #allocation3 [shape = 's32[2]{0}', space=sflag, size = 0x8, scoped, tag = 'scoped memory for estimate_light.1']
    #allocation4 [shape = 'u8[16384]{0}', space=vmem, size = 0x4000, scoped, tag = 'input window, operand 4']
    #allocation5 [shape = 's32[2]{0}', space=sflag, size = 0x8, scoped, tag = 'scoped memory for estimate_light.1']
    %10 = vsyncpa [#allocation3], 0
    %s11 = scalar_lea.sflag [#allocation3], 1
    %12 = vsyncpa %s11, 0
    %13 = vsyncpa [#allocation5], 0
    %s14 = scalar_lea.sflag [#allocation5], 1
    %15 = vsyncpa %s14, 0
    loop: start=0, step=1, limit=4
    $region2: #{estimate_light.1} parent=1 // loop_pre_header
      _
    $region3: #{estimate_light.1} parent=1 // loop_header
      %s17 = sphi 0, %s21
      %p18 = scmp.ge.s32.totalorder %s17, 4
      %s24 = sphi 0, %s36
      %s25 = sphi 0, %s32
      %s26 = sphi 0, %s24
      %s27 = sphi 0, %s25
      %s28 = sphi 0, %s26
      %s29 = sphi 0, %s27
      %s41 = sphi 0, %s43
      %s44 = sphi 0, %s41
      %s45 = sphi 0, %s44
      %s61 = sphi 0, %s45
      %s69 = sphi 0, %s71
      %s72 = sphi 0, %s69
      %s73 = sphi 0, %s72
      %s89 = sphi 0, %s73
      %s105 = sphi 0, %s107
      %s108 = sphi 0, %s105
      %s109 = sphi 0, %s108
      %s125 = sphi 0, %s109
      %s141 = sphi 0, %s143
      %s144 = sphi 0, %s141
      %s145 = sphi 0, %s144
      %s161 = sphi 0, %s145
      %s169 = sphi 0, %s171
      %s172 = sphi 0, %s169
      %s173 = sphi 0, %s172
      %s189 = sphi 0, %s173
      %s197 = sphi 0, %s199
      %s200 = sphi 0, %s197
      %s201 = sphi 0, %s200
      %s217 = sphi 0, %s201
    $region4: #{estimate_light.1} parent=1 // loop_header_branch
      %20 = sbr.rel (%p18) target = $region8
    $region5: #{estimate_light.1} parent=1 // loop_body
      %s22 = ssub.s32 %s17, 1
      %s23 = ssub.s32 %s17, 2
      %s30 = sadd.s32 1, %s25
      %p31 = scmp.ge.s32.totalorder %s30, 1
      %s32 = scalar_select %p31, 0, %s30
      %s33 = sadd.s32 1, %s24
      %s34 = scalar_select %p31, %s33, %s24
      %p35 = scmp.ge.s32.totalorder %s34, 2
      %s36 = scalar_select %p35, 0, %s34
      %s37 = ssub.s32 %s24, %s36
      %s38 = ssub.s32 %s25, %s32
      %s39 = sor.u32 %s37, %s38
      %p40 = scmp.eq.s32.totalorder %s39, 0
      %s42 = sadd.s32 %s41, 1
      %s43 = scalar_select %p40, %s41, %s42
      %p46 = pneg %p40
      %p47 = scmp.eq.s32.totalorder %s17, 1
      %p48 = por %p46, %p47
      %p49 = scmp.ne.s32.totalorder %s41, %s44
      %p50 = scmp.eq.s32.totalorder %s17, 0
      %p51 = por %p49, %p50
      %p52 = scmp.ne.s32.totalorder %s41, %s44
      %p53 = scmp.eq.s32.totalorder %s22, 1
      %p54 = por %p52, %p53
      %p55 = scmp.ne.s32.totalorder %s44, %s45
      %p56 = scmp.eq.s32.totalorder %s22, 0
      %p57 = por %p55, %p56
      %p58 = scmp.ne.s32.totalorder %s44, %s45
      %p59 = scmp.eq.s32.totalorder %s23, 1
      %p60 = por %p58, %p59
      %p62 = scmp.ne.s32.totalorder %s45, %s61
      %p63 = scmp.eq.s32.totalorder %s23, 0
      %p64 = por %p62, %p63
      %s65 = ssub.s32 %s24, %s36
      %s66 = ssub.s32 %s25, %s32
      %s67 = sor.u32 %s65, %s66
      %p68 = scmp.eq.s32.totalorder %s67, 0
      %s70 = sadd.s32 %s69, 1
      %s71 = scalar_select %p68, %s69, %s70
      %p74 = pneg %p68
      %p75 = scmp.eq.s32.totalorder %s17, 1
      %p76 = por %p74, %p75
      %p77 = scmp.ne.s32.totalorder %s69, %s72
      %p78 = scmp.eq.s32.totalorder %s17, 0
      %p79 = por %p77, %p78
      %p80 = scmp.ne.s32.totalorder %s69, %s72
      %p81 = scmp.eq.s32.totalorder %s22, 1
      %p82 = por %p80, %p81
      %p83 = scmp.ne.s32.totalorder %s72, %s73
      %p84 = scmp.eq.s32.totalorder %s22, 0
      %p85 = por %p83, %p84
      %p86 = scmp.ne.s32.totalorder %s72, %s73
      %p87 = scmp.eq.s32.totalorder %s23, 1
      %p88 = por %p86, %p87
      %p90 = scmp.ne.s32.totalorder %s73, %s89
      %p91 = scmp.eq.s32.totalorder %s23, 0
      %p92 = por %p90, %p91
      %s93 = smul.u32 %s25, 2
      %s94 = ssub.s32 %s93, 1
      %p95 = scmp.gt.s32.totalorder %s94, 0
      %s96 = scalar_select %p95, %s94, 0
      %s97 = smul.u32 %s32, 2
      %s98 = ssub.s32 %s97, 1
      %p99 = scmp.gt.s32.totalorder %s98, 0
      %s100 = scalar_select %p99, %s98, 0
      %s101 = ssub.s32 %s24, %s36
      %s102 = ssub.s32 %s96, %s100
      %s103 = sor.u32 %s101, %s102
      %p104 = scmp.eq.s32.totalorder %s103, 0
      %s106 = sadd.s32 %s105, 1
      %s107 = scalar_select %p104, %s105, %s106
      %p110 = pneg %p104
      %p111 = scmp.eq.s32.totalorder %s17, 1
      %p112 = por %p110, %p111
      %p113 = scmp.ne.s32.totalorder %s105, %s108
      %p114 = scmp.eq.s32.totalorder %s17, 0
      %p115 = por %p113, %p114
      %p116 = scmp.ne.s32.totalorder %s105, %s108
      %p117 = scmp.eq.s32.totalorder %s22, 1
      %p118 = por %p116, %p117
      %p119 = scmp.ne.s32.totalorder %s108, %s109
      %p120 = scmp.eq.s32.totalorder %s22, 0
      %p121 = por %p119, %p120
      %p122 = scmp.ne.s32.totalorder %s108, %s109
      %p123 = scmp.eq.s32.totalorder %s23, 1
      %p124 = por %p122, %p123
      %p126 = scmp.ne.s32.totalorder %s109, %s125
      %p127 = scmp.eq.s32.totalorder %s23, 0
      %p128 = por %p126, %p127
      %s129 = smul.u32 %s25, 2
      %s130 = sadd.s32 %s129, 2
      %p131 = scmp.lt.s32.totalorder %s130, 1
      %s132 = scalar_select %p131, %s130, 1
      %s133 = smul.u32 %s32, 2
      %s134 = sadd.s32 %s133, 2
      %p135 = scmp.lt.s32.totalorder %s134, 1
      %s136 = scalar_select %p135, %s134, 1
      %s137 = ssub.s32 %s24, %s36
      %s138 = ssub.s32 %s132, %s136
      %s139 = sor.u32 %s137, %s138
      %p140 = scmp.eq.s32.totalorder %s139, 0
      %s142 = sadd.s32 %s141, 1
      %s143 = scalar_select %p140, %s141, %s142
      %p146 = pneg %p140
      %p147 = scmp.eq.s32.totalorder %s17, 1
      %p148 = por %p146, %p147
      %p149 = scmp.ne.s32.totalorder %s141, %s144
      %p150 = scmp.eq.s32.totalorder %s17, 0
      %p151 = por %p149, %p150
      %p152 = scmp.ne.s32.totalorder %s141, %s144
      %p153 = scmp.eq.s32.totalorder %s22, 1
      %p154 = por %p152, %p153
      %p155 = scmp.ne.s32.totalorder %s144, %s145
      %p156 = scmp.eq.s32.totalorder %s22, 0
      %p157 = por %p155, %p156
      %p158 = scmp.ne.s32.totalorder %s144, %s145
      %p159 = scmp.eq.s32.totalorder %s23, 1
      %p160 = por %p158, %p159
      %p162 = scmp.ne.s32.totalorder %s145, %s161
      %p163 = scmp.eq.s32.totalorder %s23, 0
      %p164 = por %p162, %p163
      %s165 = ssub.s32 %s24, %s36
      %s166 = ssub.s32 %s25, %s32
      %s167 = sor.u32 %s165, %s166
      %p168 = scmp.eq.s32.totalorder %s167, 0
      %s170 = sadd.s32 %s169, 1
      %s171 = scalar_select %p168, %s169, %s170
      %p174 = pneg %p168
      %p175 = scmp.eq.s32.totalorder %s17, 1
      %p176 = por %p174, %p175
      %p177 = scmp.ne.s32.totalorder %s169, %s172
      %p178 = scmp.eq.s32.totalorder %s17, 0
      %p179 = por %p177, %p178
      %p180 = scmp.ne.s32.totalorder %s169, %s172
      %p181 = scmp.eq.s32.totalorder %s22, 1
      %p182 = por %p180, %p181
      %p183 = scmp.ne.s32.totalorder %s172, %s173
      %p184 = scmp.eq.s32.totalorder %s22, 0
      %p185 = por %p183, %p184
      %p186 = scmp.ne.s32.totalorder %s172, %s173
      %p187 = scmp.eq.s32.totalorder %s23, 1
      %p188 = por %p186, %p187
      %p190 = scmp.ne.s32.totalorder %s173, %s189
      %p191 = scmp.eq.s32.totalorder %s23, 0
      %p192 = por %p190, %p191
      %s193 = ssub.s32 %s24, %s36
      %s194 = ssub.s32 %s25, %s32
      %s195 = sor.u32 %s193, %s194
      %p196 = scmp.eq.s32.totalorder %s195, 0
      %s198 = sadd.s32 %s197, 1
      %s199 = scalar_select %p196, %s197, %s198
      %p202 = pneg %p196
      %p203 = scmp.eq.s32.totalorder %s17, 1
      %p204 = por %p202, %p203
      %p205 = scmp.ne.s32.totalorder %s197, %s200
      %p206 = scmp.eq.s32.totalorder %s17, 0
      %p207 = por %p205, %p206
      %p208 = scmp.ne.s32.totalorder %s197, %s200
      %p209 = scmp.eq.s32.totalorder %s22, 1
      %p210 = por %p208, %p209
      %p211 = scmp.ne.s32.totalorder %s200, %s201
      %p212 = scmp.eq.s32.totalorder %s22, 0
      %p213 = por %p211, %p212
      %p214 = scmp.ne.s32.totalorder %s200, %s201
      %p215 = scmp.eq.s32.totalorder %s23, 1
      %p216 = por %p214, %p215
      %p218 = scmp.ne.s32.totalorder %s201, %s217
      %p219 = scmp.eq.s32.totalorder %s23, 0
      %p220 = por %p218, %p219
      %p221 = scmp.le.s32.totalorder 1, %s17
      %p222 = scmp.lt.s32.totalorder %s17, 3
      %p223 = pnand %p221, %p222
      %p224 = pneg %p223
      // Predicated region
      $region9: #{estimate_light.1} parent=5 // pred_check
        _
      $region10: #{estimate_light.1} parent=5 // pred_check_branch
        %226 = sbr.rel (%p223) target = $region12
      $region11: #{estimate_light.1} parent=5 // pred_region
        %s227 = ssub.s32 %s17, 1
      $region12: #{estimate_light.1} parent=5 // pred_fallthru
        _
      %p228 = scmp.lt.s32.totalorder %s17, 2
      // Predicated region
      $region13: #{estimate_light.1} parent=5 // pred_check
        %p229 = pneg %p228
      $region14: #{estimate_light.1} parent=5 // pred_check_branch
        %231 = sbr.rel (%p229) target = $region16
      $region15: #{estimate_light.1} parent=5 // pred_region
        // Predicated region
        $region17: #{estimate_light.1} parent=15 // pred_check
          %p232 = pneg %p51
        $region18: #{estimate_light.1} parent=15 // pred_check_branch
          %234 = sbr.rel (%p232) target = $region20
        $region19: #{estimate_light.1} parent=15 // pred_region
          %s235 = sand.u32 %s41, 1
          %s236 = scalar_lea.sflag [#allocation3], %s235
          %s237 = sand.u32 %s41, 1
          %s238 = smul.addr %s237, 48
          %s239 = scalar_lea.vmem [#allocation2], %s238
          %s240 = smul.u32 2, %s25
          %s242 = ssub.s32 768, 768
          %243 = vsyncadd %s236, %s242
          %s244 = smul.addr %s24, 6
          %s245 = sadd.s32 %s240, %s244
          %s246 = smul.addr %s245, 128
          %s247 = scalar_lea.hbm %s0, %s246
          %s248 = sshll.u32 %s239, 4
          %s249 = int_to_ptr.vmem [resolvable:$true] %s248
          %254 = dma.hbm_to_vmem [thread:$0]  %s247, 768, %s249, %s236, 128, 128, 8
        $region20: #{estimate_light.1} parent=15 // pred_fallthru
          _
        // Predicated region
        $region21: #{estimate_light.1} parent=15 // pred_check
          %p255 = pneg %p79
        $region22: #{estimate_light.1} parent=15 // pred_check_branch
          %257 = sbr.rel (%p255) target = $region24
        $region23: #{estimate_light.1} parent=15 // pred_region
          %s258 = smul.u32 2, %s25
          %p259 = scmp.lt.s32.totalorder %s24, 1
          %s260 = scalar_select %p259, %s24, 1
          %p261 = scmp.lt.s32.totalorder %s258, 1
          %s262 = scalar_select %p261, %s258, 1
          %s263 = smul.addr %s260, 2
          %s264 = sadd.s32 %s262, %s263
          %s265 = smul.addr %s264, 8
          %s266 = scalar_lea.vmem %s1, %s265
          %s267 = smul.u32 2, %s25
        $region24: #{estimate_light.1} parent=15 // pred_fallthru
          _
        // Predicated region
        $region25: #{estimate_light.1} parent=15 // pred_check
          %p268 = pneg %p115
        $region26: #{estimate_light.1} parent=15 // pred_check_branch
          %270 = sbr.rel (%p268) target = $region28
        $region27: #{estimate_light.1} parent=15 // pred_region
          %s271 = smul.u32 %s25, 2
          %s272 = ssub.s32 %s271, 1
          %p273 = scmp.gt.s32.totalorder %s272, 0
          %s274 = scalar_select %p273, %s272, 0
          %p275 = scmp.lt.s32.totalorder %s24, 1
          %s276 = scalar_select %p275, %s24, 1
          %p277 = scmp.lt.s32.totalorder %s274, 1
          %s278 = scalar_select %p277, %s274, 1
          %s279 = smul.addr %s276, 2
          %s280 = sadd.s32 %s278, %s279
          %s281 = smul.addr %s280, 8
          %s282 = scalar_lea.vmem %s2, %s281
          %s283 = smul.u32 %s25, 2
          %s284 = ssub.s32 %s283, 1
          %p285 = scmp.gt.s32.totalorder %s284, 0
          %s286 = scalar_select %p285, %s284, 0
        $region28: #{estimate_light.1} parent=15 // pred_fallthru
          _
        // Predicated region
        $region29: #{estimate_light.1} parent=15 // pred_check
          %p287 = pneg %p151
        $region30: #{estimate_light.1} parent=15 // pred_check_branch
          %289 = sbr.rel (%p287) target = $region32
        $region31: #{estimate_light.1} parent=15 // pred_region
          %s290 = smul.u32 %s25, 2
          %s291 = sadd.s32 %s290, 2
          %p292 = scmp.lt.s32.totalorder %s291, 1
          %s293 = scalar_select %p292, %s291, 1
          %p294 = scmp.lt.s32.totalorder %s24, 1
          %s295 = scalar_select %p294, %s24, 1
          %p296 = scmp.lt.s32.totalorder %s293, 1
          %s297 = scalar_select %p296, %s293, 1
          %s298 = smul.addr %s295, 2
          %s299 = sadd.s32 %s297, %s298
          %s300 = smul.addr %s299, 8
          %s301 = scalar_lea.vmem %s3, %s300
          %s302 = smul.u32 %s25, 2
          %s303 = sadd.s32 %s302, 2
          %p304 = scmp.lt.s32.totalorder %s303, 1
          %s305 = scalar_select %p304, %s303, 1
        $region32: #{estimate_light.1} parent=15 // pred_fallthru
          _
        // Predicated region
        $region33: #{estimate_light.1} parent=15 // pred_check
          %p306 = pneg %p179
        $region34: #{estimate_light.1} parent=15 // pred_check_branch
          %308 = sbr.rel (%p306) target = $region36
        $region35: #{estimate_light.1} parent=15 // pred_region
          %s309 = sand.u32 %s169, 1
          %s310 = scalar_lea.sflag [#allocation5], %s309
          %s311 = sand.u32 %s169, 1
          %s312 = smul.addr %s311, 16
          %s313 = scalar_lea.vmem [#allocation4], %s312
          %s314 = smul.u32 2, %s25
          %s316 = ssub.s32 256, 256
          %317 = vsyncadd %s310, %s316
          %s318 = sadd.s32 %s314, 4
          %s319 = smul.addr %s24, 6
          %s320 = sadd.s32 %s318, %s319
          %s321 = smul.addr %s320, 128
          %s322 = scalar_lea.hbm %s4, %s321
          %s323 = sshll.u32 %s313, 4
          %s324 = int_to_ptr.vmem [resolvable:$true] %s323
          %329 = dma.hbm_to_vmem [thread:$0]  %s322, 256, %s324, %s310, 128, 128, 8
        $region36: #{estimate_light.1} parent=15 // pred_fallthru
          _
      $region16: #{estimate_light.1} parent=5 // pred_fallthru
        _
      %p330 = scmp.le.s32.totalorder 1, %s17
      %p331 = scmp.lt.s32.totalorder %s17, 3
      %p332 = pnand %p330, %p331
      %p333 = pneg %p332
      // Predicated region
      $region37: #{estimate_light.1} parent=5 // pred_check
        _
      $region38: #{estimate_light.1} parent=5 // pred_check_branch
        %335 = sbr.rel (%p332) target = $region40
      $region39: #{estimate_light.1} parent=5 // pred_region
        %s336 = ssub.s32 %s17, 1
        %s337 = sand.u32 %s44, 1
        %s338 = scalar_lea.sflag [#allocation3], %s337
        %s339 = sand.u32 %s44, 1
        %s340 = smul.addr %s339, 48
        %s341 = scalar_lea.vmem [#allocation2], %s340
        // Predicated region
        $region41: #{estimate_light.1} parent=39 // pred_check
          %p342 = pneg %p57
        $region42: #{estimate_light.1} parent=39 // pred_check_branch
          %344 = sbr.rel (%p342) target = $region44
        $region43: #{estimate_light.1} parent=39 // pred_region
          %345 = dma.done %s338, 768
        $region44: #{estimate_light.1} parent=39 // pred_fallthru
          _
        %s346 = sand.u32 %s172, 1
        %s347 = scalar_lea.sflag [#allocation5], %s346
        %s348 = sand.u32 %s172, 1
        %s349 = smul.addr %s348, 16
        %s350 = scalar_lea.vmem [#allocation4], %s349
        // Predicated region
        $region45: #{estimate_light.1} parent=39 // pred_check
          %p351 = pneg %p185
        $region46: #{estimate_light.1} parent=39 // pred_check_branch
          %353 = sbr.rel (%p351) target = $region48
        $region47: #{estimate_light.1} parent=39 // pred_region
          %354 = dma.done %s347, 256
        $region48: #{estimate_light.1} parent=39 // pred_fallthru
          _
        %s355 = sand.u32 %s44, 1
        %s356 = scalar_lea.sflag [#allocation3], %s355
        %s357 = sand.u32 %s44, 1
        %s358 = smul.addr %s357, 48
        %s359 = scalar_lea.vmem [#allocation2], %s358
        %p360 = pneg %p57
        %p361 = pneg %p54
        %s362 = smul.u32 2, %s27
        %p363 = scmp.lt.s32.totalorder %s26, 1
        %s364 = scalar_select %p363, %s26, 1
        %p365 = scmp.lt.s32.totalorder %s362, 1
        %s366 = scalar_select %p365, %s362, 1
        %s367 = smul.addr %s364, 2
        %s368 = sadd.s32 %s366, %s367
        %s369 = smul.addr %s368, 8
        %s370 = scalar_lea.vmem %s1, %s369
        %p371 = pneg %p85
        %p372 = pneg %p82
        %s373 = smul.u32 %s27, 2
        %s374 = ssub.s32 %s373, 1
        %p375 = scmp.gt.s32.totalorder %s374, 0
        %s376 = scalar_select %p375, %s374, 0
        %p377 = scmp.lt.s32.totalorder %s26, 1
        %s378 = scalar_select %p377, %s26, 1
        %p379 = scmp.lt.s32.totalorder %s376, 1
        %s380 = scalar_select %p379, %s376, 1
        %s381 = smul.addr %s378, 2
        %s382 = sadd.s32 %s380, %s381
        %s383 = smul.addr %s382, 8
        %s384 = scalar_lea.vmem %s2, %s383
        %p385 = pneg %p121
        %p386 = pneg %p118
        %s387 = smul.u32 %s27, 2
        %s388 = sadd.s32 %s387, 2
        %p389 = scmp.lt.s32.totalorder %s388, 1
        %s390 = scalar_select %p389, %s388, 1
        %p391 = scmp.lt.s32.totalorder %s26, 1
        %s392 = scalar_select %p391, %s26, 1
        %p393 = scmp.lt.s32.totalorder %s390, 1
        %s394 = scalar_select %p393, %s390, 1
        %s395 = smul.addr %s392, 2
        %s396 = sadd.s32 %s394, %s395
        %s397 = smul.addr %s396, 8
        %s398 = scalar_lea.vmem %s3, %s397
        %p399 = pneg %p157
        %p400 = pneg %p154
        %s401 = sand.u32 %s172, 1
        %s402 = scalar_lea.sflag [#allocation5], %s401
        %s403 = sand.u32 %s172, 1
        %s404 = smul.addr %s403, 16
        %s405 = scalar_lea.vmem [#allocation4], %s404
        %p406 = pneg %p185
        %p407 = pneg %p182
        %p408 = pneg %p213
        %p409 = pneg %p210
        %p410 = scmp.lt.s32.totalorder %s26, 1
        %s411 = scalar_select %p410, %s26, 1
        %p412 = scmp.lt.s32.totalorder %s27, 0
        %s413 = scalar_select %p412, %s27, 0
        %s414 = smul.addr %s413, 2
        %s415 = smul.addr %s411, 2
        %s416 = sadd.s32 %s414, %s415
        %s417 = smul.addr %s416, 8
        %s418 = scalar_lea.vmem %s5, %s417
        %s419 = smul.u32 2, %s27
        %s420 = smul.u32 2, %s27
        %p421 = scmp.lt.s32.totalorder %s26, 1
        %s422 = scalar_select %p421, %s26, 1
        %p423 = scmp.lt.s32.totalorder %s420, 1
        %s424 = scalar_select %p423, %s420, 1
        %s425 = smul.addr %s422, 2
        %s426 = sadd.s32 %s424, %s425
        %s427 = smul.addr %s426, 8
        %s428 = scalar_lea.vmem %s1, %s427
        %s429 = smul.u32 2, %s27
        %s430 = smul.u32 %s27, 2
        %s431 = ssub.s32 %s430, 1
        %p432 = scmp.gt.s32.totalorder %s431, 0
        %s433 = scalar_select %p432, %s431, 0
        %p434 = scmp.lt.s32.totalorder %s26, 1
        %s435 = scalar_select %p434, %s26, 1
        %p436 = scmp.lt.s32.totalorder %s433, 1
        %s437 = scalar_select %p436, %s433, 1
        %s438 = smul.addr %s435, 2
        %s439 = sadd.s32 %s437, %s438
        %s440 = smul.addr %s439, 8
        %s441 = scalar_lea.vmem %s2, %s440
        %s442 = smul.u32 %s27, 2
        %s443 = ssub.s32 %s442, 1
        %p444 = scmp.gt.s32.totalorder %s443, 0
        %s445 = scalar_select %p444, %s443, 0
        %s446 = smul.u32 %s27, 2
        %s447 = sadd.s32 %s446, 2
        %p448 = scmp.lt.s32.totalorder %s447, 1
        %s449 = scalar_select %p448, %s447, 1
        %p450 = scmp.lt.s32.totalorder %s26, 1
        %s451 = scalar_select %p450, %s26, 1
        %p452 = scmp.lt.s32.totalorder %s449, 1
        %s453 = scalar_select %p452, %s449, 1
        %s454 = smul.addr %s451, 2
        %s455 = sadd.s32 %s453, %s454
        %s456 = smul.addr %s455, 8
        %s457 = scalar_lea.vmem %s3, %s456
        %s458 = smul.u32 %s27, 2
        %s459 = sadd.s32 %s458, 2
        %p460 = scmp.lt.s32.totalorder %s459, 1
        %s461 = scalar_select %p460, %s459, 1
        %s462 = smul.u32 2, %s27
        %p463 = scmp.lt.s32.totalorder %s26, 1
        %s464 = scalar_select %p463, %s26, 1
        %p465 = scmp.lt.s32.totalorder %s27, 0
        %s466 = scalar_select %p465, %s27, 0
        %s467 = smul.addr %s466, 2
        %s468 = smul.addr %s464, 2
        %s469 = sadd.s32 %s467, %s468
        %s470 = smul.addr %s469, 8
        %s471 = scalar_lea.vmem %s5, %s470
        %s472 = smul.u32 %s27, 16
        %v473 = vld [vmem:[%s341] sm:$0xff]
        %v474 = vld [vmem:[%s341 + $0x8] sm:$0xff]
        %v475 = vld [vmem:[%s341 + $0x10] sm:$0xff]
        %v476 = vld [vmem:[%s341 + $0x18] sm:$0xff]
        %v477 = vld [vmem:[%s341 + $0x20] sm:$0xff]
        %v478 = vld [vmem:[%s341 + $0x28] sm:$0xff]
        %v479 = vadd.f32 %v473, 1.0
        %v480 = vadd.f32 %v474, 1.0
        %v481 = vadd.f32 %v475, 1.0
        %v482 = vadd.f32 %v476, 1.0
        %v483 = vadd.f32 %v477, 1.0
        %v484 = vadd.f32 %v478, 1.0
        %v485 = vmul.f32 %v479, 0.5
        %v486 = vmul.f32 %v480, 0.5
        %v487 = vmul.f32 %v481, 0.5
        %v488 = vmul.f32 %v482, 0.5
        %v489 = vmul.f32 %v483, 0.5
        %v490 = vmul.f32 %v484, 0.5
        %v491 = vld [vmem:[%s428] sm:$0xff]
        %v492 = vld [vmem:[%s428 + $0x8] sm:$0xff]
        %v493 = vadd.f32 %v491, 1.0
        %v494 = vadd.f32 %v492, 1.0
        %v495 = vmul.f32 %v493, 0.5
        %v496 = vmul.f32 %v494, 0.5
        %v497 = vld [vmem:[%s350] sm:$0xff]
        %v498 = vld [vmem:[%s350 + $0x8] sm:$0xff]
        %v499 = vld [vmem:[%s441] sm:$0xff]
        %v500 = vadd.f32 %v499, 1.0
        %v501 = vmul.f32 %v500, 0.5
        %v502 = vld [vmem:[%s457] sm:$0xff]
        %v503 = vadd.f32 %v502, 1.0
        %v504 = vmul.f32 %v503, 0.5
        %vm505 = vcmp.ne.f32.partialorder %v485, 0.0
        %vm506 = vcmp.ne.f32.partialorder %v486, 0.0
        %v507 = vsel %vm505, 1.0, 0.0
        %v508 = vsel %vm506, 1.0, 0.0
        %v509 = vmul.f32 %v485, %v507
        %v510 = vmul.f32 %v486, %v508
        %v511 = vmul.f32 %v487, %v507
        %v512 = vmul.f32 %v488, %v508
        %v513 = vmul.f32 %v489, %v507
        %v514 = vmul.f32 %v490, %v508
        %v515 = vlaneseq
        %v516 = vshrl.u32 %v515, 7
        %v517 = vadd.s32 %v516, 8
        %v518 = vlaneseq
        %v519 = vand.u32 %v518, 127
        %v520 = vstv %s472
        %v521 = vadd.s32 %v516, %v520
        %v522 = vadd.s32 %v517, %v520
        %v523 = vcvt.s32.f32 %v519
        %v524 = vsub.f32 %v523, 256.0
        %v525 = vmul.f32 %v524, 0.00164375
        %v526 = vcvt.s32.f32 %v521
        %v527 = vcvt.s32.f32 %v522
        %v528 = vsub.f32 %v526, 256.0
        %v529 = vsub.f32 %v527, 256.0
        %v530 = vmul.f32 %v528, 0.00164375
        %v531 = vmul.f32 %v529, 0.00164375
        %v533 = vrot.slane %v496, 7
        %vm536 = vcmask 1040384
        %v537 = vrot.slane %v495, 7
        %v538 = vsel %vm536, %v537, %v533
        %v541 = vsel %vm536, %v533, %v537
        %vm542 = vcmp.eq.s32.totalorder %v516, 0
        %vm543 = vcmp.eq.s32.totalorder %v517, 0
        %v544 = vlaneseq
        %v545 = vshrl.u32 %v544, 7
        %v546 = vsub.s32 7, %v545
        %v547 = vrot.slane %v501, %v546
        %v548 = vsel %vm542, %v547, %v541
        %v549 = vsel %vm543, %v547, %v538
        %vm550 = vcmask 1046528
        %v551 = vrot.slane %v495, 1
        %v552 = vrot.slane %v496, 1
        %v553 = vsel %vm550, %v551, %v552
        %v557 = vsel %vm550, %v552, %v551
        %vm558 = vcmp.eq.s32.totalorder %v516, 15
        %vm559 = vcmp.eq.s32.totalorder %v517, 15
        %v560 = vlaneseq
        %v561 = vshrl.u32 %v560, 7
        %v562 = vsub.s32 0, %v561
        %v563 = vrot.slane %v504, %v562
        %v564 = vsel %vm558, %v563, %v553
        %v565 = vsel %vm559, %v563, %v557
        %566 = vrot.lane.b32.xlu0 %v495, 113
        %v567 = vpop.permute.xlu0 %566
        %568 = vrot.lane.b32.xlu0 %v496, 113
        %v569 = vpop.permute.xlu0 %568
        %572 = vrot.lane.b32.xlu0 %v495, 1
        %v573 = vpop.permute.xlu0 %572
        %574 = vrot.lane.b32.xlu0 %v496, 1
        %v575 = vpop.permute.xlu0 %574
        %vm578 = vcmask 7168
        %v579 = vsel %vm578, %v567, %v573
        %v580 = vsel %vm578, %v569, %v575
        %581 = vrot.lane.b32.xlu0 %v495, 127
        %v582 = vpop.permute.xlu0 %581
        %583 = vrot.lane.b32.xlu0 %v496, 127
        %v584 = vpop.permute.xlu0 %583
        %587 = vrot.lane.b32.xlu0 %v495, 15
        %v588 = vpop.permute.xlu0 %587
        %589 = vrot.lane.b32.xlu0 %v496, 15
        %v590 = vpop.permute.xlu0 %589
        %vm593 = vcmask 121856
        %v594 = vsel %vm593, %v582, %v588
        %v595 = vsel %vm593, %v584, %v590
        %v596 = vmul.f32 %v525, %v495
        %v597 = vmul.f32 %v525, %v496
        %v598 = vmul.f32 %v530, %v495
        %v599 = vmul.f32 %v531, %v496
        %v600 = vsub.f32 %v495, %v594
        %v601 = vsub.f32 %v496, %v595
        %v602 = vsub.f32 %v495, %v579
        %v603 = vsub.f32 %v496, %v580
        %v604 = vsub.f32 %v564, %v495
        %v605 = vsub.f32 %v565, %v496
        %v606 = vsub.f32 %v548, %v495
        %v607 = vsub.f32 %v549, %v496
        %v608 = vadd.f32 %v525, 0.00164375
        %v609 = vmul.f32 %v608, %v594
        %v610 = vmul.f32 %v608, %v595
        %v611 = vsub.f32 %v596, %v609
        %v612 = vsub.f32 %v597, %v610
        %v613 = vmul.f32 %v530, %v600
        %v614 = vmul.f32 %v531, %v601
        %v615 = vmul.f32 %v525, %v604
        %v616 = vmul.f32 %v525, %v605
        %v617 = vadd.f32 %v530, 0.00164375
        %v618 = vadd.f32 %v531, 0.00164375
        %v619 = vmul.f32 %v617, %v564
        %v620 = vmul.f32 %v618, %v565
        %v621 = vsub.f32 %v619, %v598
        %v622 = vsub.f32 %v620, %v599
        %v623 = vsub.f32 %v525, 0.00164375
        %v624 = vmul.f32 %v623, %v579
        %v625 = vmul.f32 %v623, %v580
        %v626 = vsub.f32 %v596, %v624
        %v627 = vsub.f32 %v597, %v625
        %v628 = vmul.f32 %v530, %v602
        %v629 = vmul.f32 %v531, %v603
        %v630 = vmul.f32 %v525, %v606
        %v631 = vmul.f32 %v525, %v607
        %v632 = vsub.f32 %v530, 0.00164375
        %v633 = vsub.f32 %v531, 0.00164375
        %v634 = vmul.f32 %v632, %v548
        %v635 = vmul.f32 %v633, %v549
        %v636 = vsub.f32 %v634, %v598
        %v637 = vsub.f32 %v635, %v599
        %v638 = vmul.f32 %v613, %v604
        %v639 = vmul.f32 %v614, %v605
        %v640 = vmul.f32 %v600, %v621
        %v641 = vmul.f32 %v601, %v622
        %v642 = vsub.f32 %v638, %v640
        %v643 = vsub.f32 %v639, %v641
        %v644 = vmul.f32 %v600, %v615
        %v645 = vmul.f32 %v601, %v616
        %v646 = vmul.f32 %v611, %v604
        %v647 = vmul.f32 %v612, %v605
        %v648 = vsub.f32 %v644, %v646
        %v649 = vsub.f32 %v645, %v647
        %v650 = vmul.f32 %v611, %v621
        %v651 = vmul.f32 %v612, %v622
        %v652 = vmul.f32 %v613, %v615
        %v653 = vmul.f32 %v614, %v616
        %v654 = vsub.f32 %v650, %v652
        %v655 = vsub.f32 %v651, %v653
        %v656 = vmul.f32 %v628, %v606
        %v657 = vmul.f32 %v629, %v607
        %v658 = vmul.f32 %v602, %v636
        %v659 = vmul.f32 %v603, %v637
        %v660 = vsub.f32 %v656, %v658
        %v661 = vsub.f32 %v657, %v659
        %v662 = vmul.f32 %v602, %v630
        %v663 = vmul.f32 %v603, %v631
        %v664 = vmul.f32 %v626, %v606
        %v665 = vmul.f32 %v627, %v607
        %v666 = vsub.f32 %v662, %v664
        %v667 = vsub.f32 %v663, %v665
        %v668 = vmul.f32 %v626, %v636
        %v669 = vmul.f32 %v627, %v637
        %v670 = vmul.f32 %v628, %v630
        %v671 = vmul.f32 %v629, %v631
        %v672 = vsub.f32 %v668, %v670
        %v673 = vsub.f32 %v669, %v671
        %v674 = vadd.f32 %v642, %v660
        %v675 = vadd.f32 %v643, %v661
        %v676 = vadd.f32 %v648, %v666
        %v677 = vadd.f32 %v649, %v667
        %v678 = vadd.f32 %v654, %v672
        %v679 = vadd.f32 %v655, %v673
        %v680 = vmul.f32 %v674, %v674
        %v681 = vmul.f32 %v675, %v675
        %v682 = vmul.f32 %v676, %v676
        %v683 = vmul.f32 %v677, %v677
        %v684 = vadd.f32 %v680, %v682
        %v685 = vadd.f32 %v681, %v683
        %v686 = vmul.f32 %v678, %v678
        %v687 = vmul.f32 %v679, %v679
        %v688 = vadd.f32 %v684, %v686
        %v689 = vadd.f32 %v685, %v687
        %v690 = vmax.f32 %v688, 1e-20
        %v691 = vmax.f32 %v689, 1e-20
        %v692 = vrsqrt.pop %v690
        %v693 = vrsqrt.pop %v691
        %v694 = vmul.f32 %v674, %v692
        %v695 = vmul.f32 %v675, %v693
        %v696 = vmul.f32 %v676, %v692
        %v697 = vmul.f32 %v677, %v693
        %v698 = vmul.f32 %v678, %v692
        %v699 = vmul.f32 %v679, %v693
        %v700 = vmul.f32 %v688, %v692
        %v701 = vmul.f32 %v689, %v693
        %vm702 = vcmp.ge.s32.totalorder %v521, 1
        %vm703 = vcmp.ge.s32.totalorder %v522, 1
        %vm704 = vcmp.le.s32.totalorder %v521, 14
        %vm705 = vcmp.le.s32.totalorder %v522, 14
        %vm706 = vmand %vm702, %vm704
        %vm707 = vmand %vm703, %vm705
        %vm708 = vcmp.ge.s32.totalorder %v519, 1
        %vm709 = vmand %vm706, %vm708
        %vm710 = vmand %vm707, %vm708
        %vm711 = vcmp.le.s32.totalorder %v519, 14
        %vm712 = vmand %vm709, %vm711
        %vm713 = vmand %vm710, %vm711
        %v714 = vsel %vm712, 1, 0
        %v715 = vsel %vm713, 1, 0
        %v716 = vcvt.s32.f32 %v714
        %v717 = vcvt.s32.f32 %v715
        %v718 = vmul.f32 %v497, %v507
        %v719 = vmul.f32 %v498, %v508
        %v720 = vmul.f32 %v716, %v718
        %v721 = vmul.f32 %v717, %v719
        %v722 = vmul.f32 %v700, %v720
        %v723 = vmul.f32 %v701, %v721
        %v724 = vmul.f32 %v674, %v720
        %v725 = vmul.f32 %v675, %v721
        %v726 = vmul.f32 %v676, %v720
        %v727 = vmul.f32 %v677, %v721
        %v728 = vmul.f32 %v678, %v720
        %v729 = vmul.f32 %v679, %v721
        %v730 = vmul.f32 %v694, %v694
        %v731 = vmul.f32 %v695, %v695
        %v732 = vmul.f32 %v696, %v696
        %v733 = vmul.f32 %v697, %v697
        %v734 = vmul.f32 %v698, %v698
        %v735 = vmul.f32 %v699, %v699
        %v736 = vmul.f32 %v722, 0.88622653
        %v737 = vmul.f32 %v723, 0.88622653
        %v738 = vmul.f32 %v728, 1.0233263
        %v739 = vmul.f32 %v729, 1.0233263
        %v740 = vmul.f32 %v724, 1.0233263
        %v741 = vmul.f32 %v725, 1.0233263
        %v742 = vmul.f32 %v726, 1.0233263
        %v743 = vmul.f32 %v727, 1.0233263
        %v744 = vmul.f32 %v734, 2.0
        %v745 = vmul.f32 %v735, 2.0
        %v746 = vsub.f32 %v744, %v730
        %v747 = vsub.f32 %v745, %v731
        %v748 = vsub.f32 %v746, %v732
        %v749 = vsub.f32 %v747, %v733
        %v750 = vmul.f32 %v748, %v722
        %v751 = vmul.f32 %v749, %v723
        %v752 = vmul.f32 %v750, 0.24770786
        %v753 = vmul.f32 %v751, 0.24770786
        %v754 = vmul.f32 %v694, %v698
        %v755 = vmul.f32 %v695, %v699
        %v756 = vmul.f32 %v754, %v722
        %v757 = vmul.f32 %v755, %v723
        %v758 = vmul.f32 %v756, 0.85808516
        %v759 = vmul.f32 %v757, 0.85808516
        %v760 = vmul.f32 %v696, %v698
        %v761 = vmul.f32 %v697, %v699
        %v762 = vmul.f32 %v760, %v722
        %v763 = vmul.f32 %v761, %v723
        %v764 = vmul.f32 %v762, 0.85808516
        %v765 = vmul.f32 %v763, 0.85808516
        %v766 = vsub.f32 %v730, %v732
        %v767 = vsub.f32 %v731, %v733
        %v768 = vmul.f32 %v766, %v722
        %v769 = vmul.f32 %v767, %v723
        %v770 = vmul.f32 %v768, 0.42904258
        %v771 = vmul.f32 %v769, 0.42904258
        %v772 = vmul.f32 %v694, %v696
        %v773 = vmul.f32 %v695, %v697
        %v774 = vmul.f32 %v772, %v722
        %v775 = vmul.f32 %v773, %v723
        %v776 = vmul.f32 %v774, 0.85808516
        %v777 = vmul.f32 %v775, 0.85808516
        %v778 = vcombine.low %v509, %v513
        %v779 = vcombine.high %v509, %v513
        %v781 = vunpack.c.l.s4 1983009808
        %v782 = vunpack.c.0.s8 %v781
        %v783 = vlaneseq
        %v784 = vshrl.u32 %v783, 7
        %v785 = vsub.s32 %v782, %v784
        %v786 = vrot.slane %v778, %v785
        %v788 = vunpack.c.l.s4 1983009808
        %v789 = vunpack.c.0.s8 %v788
        %v790 = vlaneseq
        %v791 = vshrl.u32 %v790, 7
        %v792 = vsub.s32 %v789, %v791
        %v793 = vrot.slane %v779, %v792
        %v794 = vcombine.low %v511, %v736
        %v795 = vcombine.high %v511, %v736
        %v797 = vunpack.c.l.s4 1983009808
        %v798 = vunpack.c.0.s8 %v797
        %v799 = vlaneseq
        %v800 = vshrl.u32 %v799, 7
        %v801 = vsub.s32 %v798, %v800
        %v802 = vrot.slane %v794, %v801
        %v804 = vunpack.c.l.s4 1983009808
        %v805 = vunpack.c.0.s8 %v804
        %v806 = vlaneseq
        %v807 = vshrl.u32 %v806, 7
        %v808 = vsub.s32 %v805, %v807
        %v809 = vrot.slane %v795, %v808
        %v810 = vcombine.low %v738, %v742
        %v811 = vcombine.high %v738, %v742
        %v813 = vunpack.c.l.s4 1983009808
        %v814 = vunpack.c.0.s8 %v813
        %v815 = vlaneseq
        %v816 = vshrl.u32 %v815, 7
        %v817 = vsub.s32 %v814, %v816
        %v818 = vrot.slane %v810, %v817
        %v820 = vunpack.c.l.s4 1983009808
        %v821 = vunpack.c.0.s8 %v820
        %v822 = vlaneseq
        %v823 = vshrl.u32 %v822, 7
        %v824 = vsub.s32 %v821, %v823
        %v825 = vrot.slane %v811, %v824
        %v826 = vcombine.low %v740, %v752
        %v827 = vcombine.high %v740, %v752
        %v829 = vunpack.c.l.s4 1983009808
        %v830 = vunpack.c.0.s8 %v829
        %v831 = vlaneseq
        %v832 = vshrl.u32 %v831, 7
        %v833 = vsub.s32 %v830, %v832
        %v834 = vrot.slane %v826, %v833
        %v836 = vunpack.c.l.s4 1983009808
        %v837 = vunpack.c.0.s8 %v836
        %v838 = vlaneseq
        %v839 = vshrl.u32 %v838, 7
        %v840 = vsub.s32 %v837, %v839
        %v841 = vrot.slane %v827, %v840
        %v842 = vcombine.low %v786, %v802
        %v843 = vcombine.high %v786, %v802
        %v845 = vunpack.c.l.s4 1934713408
        %v846 = vunpack.c.0.s8 %v845
        %v847 = vlaneseq
        %v848 = vshrl.u32 %v847, 7
        %v849 = vsub.s32 %v846, %v848
        %v850 = vrot.slane %v842, %v849
        %v852 = vunpack.c.l.s4 1934713408
        %v853 = vunpack.c.0.s8 %v852
        %v854 = vlaneseq
        %v855 = vshrl.u32 %v854, 7
        %v856 = vsub.s32 %v853, %v855
        %v857 = vrot.slane %v843, %v856
        %v858 = vcombine.low %v793, %v809
        %v859 = vcombine.high %v793, %v809
        %v861 = vunpack.c.l.s4 1934713408
        %v862 = vunpack.c.0.s8 %v861
        %v863 = vlaneseq
        %v864 = vshrl.u32 %v863, 7
        %v865 = vsub.s32 %v862, %v864
        %v866 = vrot.slane %v858, %v865
        %v868 = vunpack.c.l.s4 1934713408
        %v869 = vunpack.c.0.s8 %v868
        %v870 = vlaneseq
        %v871 = vshrl.u32 %v870, 7
        %v872 = vsub.s32 %v869, %v871
        %v873 = vrot.slane %v859, %v872
        %v874 = vcombine.low %v818, %v834
        %v875 = vcombine.high %v818, %v834
        %v877 = vunpack.c.l.s4 1934713408
        %v878 = vunpack.c.0.s8 %v877
        %v879 = vlaneseq
        %v880 = vshrl.u32 %v879, 7
        %v881 = vsub.s32 %v878, %v880
        %v882 = vrot.slane %v874, %v881
        %v884 = vunpack.c.l.s4 1934713408
        %v885 = vunpack.c.0.s8 %v884
        %v886 = vlaneseq
        %v887 = vshrl.u32 %v886, 7
        %v888 = vsub.s32 %v885, %v887
        %v889 = vrot.slane %v875, %v888
        %v890 = vcombine.low %v825, %v841
        %v891 = vcombine.high %v825, %v841
        %v893 = vunpack.c.l.s4 1934713408
        %v894 = vunpack.c.0.s8 %v893
        %v895 = vlaneseq
        %v896 = vshrl.u32 %v895, 7
        %v897 = vsub.s32 %v894, %v896
        %v898 = vrot.slane %v890, %v897
        %v900 = vunpack.c.l.s4 1934713408
        %v901 = vunpack.c.0.s8 %v900
        %v902 = vlaneseq
        %v903 = vshrl.u32 %v902, 7
        %v904 = vsub.s32 %v901, %v903
        %v905 = vrot.slane %v891, %v904
        %v906 = vcombine.low %v850, %v882
        %v907 = vcombine.high %v850, %v882
        %v908 = vcombine.low %v857, %v889
        %v909 = vcombine.high %v857, %v889
        %v910 = vcombine.low %v866, %v898
        %v911 = vcombine.high %v866, %v898
        %v912 = vcombine.low %v873, %v905
        %v913 = vcombine.high %v873, %v905
        %v914 = vcombine.low %v758, %v770
        %v915 = vcombine.high %v758, %v770
        %v917 = vunpack.c.l.s4 1983009808
        %v918 = vunpack.c.0.s8 %v917
        %v919 = vlaneseq
        %v920 = vshrl.u32 %v919, 7
        %v921 = vsub.s32 %v918, %v920
        %v922 = vrot.slane %v914, %v921
        %v924 = vunpack.c.l.s4 1983009808
        %v925 = vunpack.c.0.s8 %v924
        %v926 = vlaneseq
        %v927 = vshrl.u32 %v926, 7
        %v928 = vsub.s32 %v925, %v927
        %v929 = vrot.slane %v915, %v928
        %v930 = vcombine.low %v764, %v776
        %v931 = vcombine.high %v764, %v776
        %v933 = vunpack.c.l.s4 1983009808
        %v934 = vunpack.c.0.s8 %v933
        %v935 = vlaneseq
        %v936 = vshrl.u32 %v935, 7
        %v937 = vsub.s32 %v934, %v936
        %v938 = vrot.slane %v930, %v937
        %v940 = vunpack.c.l.s4 1983009808
        %v941 = vunpack.c.0.s8 %v940
        %v942 = vlaneseq
        %v943 = vshrl.u32 %v942, 7
        %v944 = vsub.s32 %v941, %v943
        %v945 = vrot.slane %v931, %v944
        %v946 = vcombine.low %v922, %v938
        %v947 = vcombine.high %v922, %v938
        %v949 = vunpack.c.l.s4 1934713408
        %v950 = vunpack.c.0.s8 %v949
        %v951 = vlaneseq
        %v952 = vshrl.u32 %v951, 7
        %v953 = vsub.s32 %v950, %v952
        %v954 = vrot.slane %v946, %v953
        %v956 = vunpack.c.l.s4 1934713408
        %v957 = vunpack.c.0.s8 %v956
        %v958 = vlaneseq
        %v959 = vshrl.u32 %v958, 7
        %v960 = vsub.s32 %v957, %v959
        %v961 = vrot.slane %v947, %v960
        %v962 = vcombine.low %v929, %v945
        %v963 = vcombine.high %v929, %v945
        %v965 = vunpack.c.l.s4 1934713408
        %v966 = vunpack.c.0.s8 %v965
        %v967 = vlaneseq
        %v968 = vshrl.u32 %v967, 7
        %v969 = vsub.s32 %v966, %v968
        %v970 = vrot.slane %v962, %v969
        %v972 = vunpack.c.l.s4 1934713408
        %v973 = vunpack.c.0.s8 %v972
        %v974 = vlaneseq
        %v975 = vshrl.u32 %v974, 7
        %v976 = vsub.s32 %v973, %v975
        %v977 = vrot.slane %v963, %v976
        %v978 = vcombine.high %v954, 0.0
        %v979 = vcombine.high %v961, 0.0
        %v980 = vcombine.high %v970, 0.0
        %v981 = vcombine.high %v977, 0.0
        %v982 = vcombine.low %v510, %v514
        %v983 = vcombine.high %v510, %v514
        %v985 = vunpack.c.l.s4 1983009808
        %v986 = vunpack.c.0.s8 %v985
        %v987 = vlaneseq
        %v988 = vshrl.u32 %v987, 7
        %v989 = vsub.s32 %v986, %v988
        %v990 = vrot.slane %v982, %v989
        %v992 = vunpack.c.l.s4 1983009808
        %v993 = vunpack.c.0.s8 %v992
        %v994 = vlaneseq
        %v995 = vshrl.u32 %v994, 7
        %v996 = vsub.s32 %v993, %v995
        %v997 = vrot.slane %v983, %v996
        %v998 = vcombine.low %v512, %v737
        %v999 = vcombine.high %v512, %v737
        %v1001 = vunpack.c.l.s4 1983009808
        %v1002 = vunpack.c.0.s8 %v1001
        %v1003 = vlaneseq
        %v1004 = vshrl.u32 %v1003, 7
        %v1005 = vsub.s32 %v1002, %v1004
        %v1006 = vrot.slane %v998, %v1005
        %v1008 = vunpack.c.l.s4 1983009808
        %v1009 = vunpack.c.0.s8 %v1008
        %v1010 = vlaneseq
        %v1011 = vshrl.u32 %v1010, 7
        %v1012 = vsub.s32 %v1009, %v1011
        %v1013 = vrot.slane %v999, %v1012
        %v1014 = vcombine.low %v739, %v743
        %v1015 = vcombine.high %v739, %v743
        %v1017 = vunpack.c.l.s4 1983009808
        %v1018 = vunpack.c.0.s8 %v1017
        %v1019 = vlaneseq
        %v1020 = vshrl.u32 %v1019, 7
        %v1021 = vsub.s32 %v1018, %v1020
        %v1022 = vrot.slane %v1014, %v1021
        %v1024 = vunpack.c.l.s4 1983009808
        %v1025 = vunpack.c.0.s8 %v1024
        %v1026 = vlaneseq
        %v1027 = vshrl.u32 %v1026, 7
        %v1028 = vsub.s32 %v1025, %v1027
        %v1029 = vrot.slane %v1015, %v1028
        %v1030 = vcombine.low %v741, %v753
        %v1031 = vcombine.high %v741, %v753
        %v1033 = vunpack.c.l.s4 1983009808
        %v1034 = vunpack.c.0.s8 %v1033
        %v1035 = vlaneseq
        %v1036 = vshrl.u32 %v1035, 7
        %v1037 = vsub.s32 %v1034, %v1036
        %v1038 = vrot.slane %v1030, %v1037
        %v1040 = vunpack.c.l.s4 1983009808
        %v1041 = vunpack.c.0.s8 %v1040
        %v1042 = vlaneseq
        %v1043 = vshrl.u32 %v1042, 7
        %v1044 = vsub.s32 %v1041, %v1043
        %v1045 = vrot.slane %v1031, %v1044
        %v1046 = vcombine.low %v990, %v1006
        %v1047 = vcombine.high %v990, %v1006
        %v1049 = vunpack.c.l.s4 1934713408
        %v1050 = vunpack.c.0.s8 %v1049
        %v1051 = vlaneseq
        %v1052 = vshrl.u32 %v1051, 7
        %v1053 = vsub.s32 %v1050, %v1052
        %v1054 = vrot.slane %v1046, %v1053
        %v1056 = vunpack.c.l.s4 1934713408
        %v1057 = vunpack.c.0.s8 %v1056
        %v1058 = vlaneseq
        %v1059 = vshrl.u32 %v1058, 7
        %v1060 = vsub.s32 %v1057, %v1059
        %v1061 = vrot.slane %v1047, %v1060
        %v1062 = vcombine.low %v997, %v1013
        %v1063 = vcombine.high %v997, %v1013
        %v1065 = vunpack.c.l.s4 1934713408
        %v1066 = vunpack.c.0.s8 %v1065
        %v1067 = vlaneseq
        %v1068 = vshrl.u32 %v1067, 7
        %v1069 = vsub.s32 %v1066, %v1068
        %v1070 = vrot.slane %v1062, %v1069
        %v1072 = vunpack.c.l.s4 1934713408
        %v1073 = vunpack.c.0.s8 %v1072
        %v1074 = vlaneseq
        %v1075 = vshrl.u32 %v1074, 7
        %v1076 = vsub.s32 %v1073, %v1075
        %v1077 = vrot.slane %v1063, %v1076
        %v1078 = vcombine.low %v1022, %v1038
        %v1079 = vcombine.high %v1022, %v1038
        %v1081 = vunpack.c.l.s4 1934713408
        %v1082 = vunpack.c.0.s8 %v1081
        %v1083 = vlaneseq
        %v1084 = vshrl.u32 %v1083, 7
        %v1085 = vsub.s32 %v1082, %v1084
        %v1086 = vrot.slane %v1078, %v1085
        %v1088 = vunpack.c.l.s4 1934713408
        %v1089 = vunpack.c.0.s8 %v1088
        %v1090 = vlaneseq
        %v1091 = vshrl.u32 %v1090, 7
        %v1092 = vsub.s32 %v1089, %v1091
        %v1093 = vrot.slane %v1079, %v1092
        %v1094 = vcombine.low %v1029, %v1045
        %v1095 = vcombine.high %v1029, %v1045
        %v1097 = vunpack.c.l.s4 1934713408
        %v1098 = vunpack.c.0.s8 %v1097
        %v1099 = vlaneseq
        %v1100 = vshrl.u32 %v1099, 7
        %v1101 = vsub.s32 %v1098, %v1100
        %v1102 = vrot.slane %v1094, %v1101
        %v1104 = vunpack.c.l.s4 1934713408
        %v1105 = vunpack.c.0.s8 %v1104
        %v1106 = vlaneseq
        %v1107 = vshrl.u32 %v1106, 7
        %v1108 = vsub.s32 %v1105, %v1107
        %v1109 = vrot.slane %v1095, %v1108
        %v1110 = vcombine.low %v1054, %v1086
        %v1111 = vcombine.high %v1054, %v1086
        %v1112 = vcombine.low %v1061, %v1093
        %v1113 = vcombine.high %v1061, %v1093
        %v1114 = vcombine.low %v1070, %v1102
        %v1115 = vcombine.high %v1070, %v1102
        %v1116 = vcombine.low %v1077, %v1109
        %v1117 = vcombine.high %v1077, %v1109
        %v1118 = vcombine.low %v759, %v771
        %v1119 = vcombine.high %v759, %v771
        %v1121 = vunpack.c.l.s4 1983009808
        %v1122 = vunpack.c.0.s8 %v1121
        %v1123 = vlaneseq
        %v1124 = vshrl.u32 %v1123, 7
        %v1125 = vsub.s32 %v1122, %v1124
        %v1126 = vrot.slane %v1118, %v1125
        %v1128 = vunpack.c.l.s4 1983009808
        %v1129 = vunpack.c.0.s8 %v1128
        %v1130 = vlaneseq
        %v1131 = vshrl.u32 %v1130, 7
        %v1132 = vsub.s32 %v1129, %v1131
        %v1133 = vrot.slane %v1119, %v1132
        %v1134 = vcombine.low %v765, %v777
        %v1135 = vcombine.high %v765, %v777
        %v1137 = vunpack.c.l.s4 1983009808
        %v1138 = vunpack.c.0.s8 %v1137
        %v1139 = vlaneseq
        %v1140 = vshrl.u32 %v1139, 7
        %v1141 = vsub.s32 %v1138, %v1140
        %v1142 = vrot.slane %v1134, %v1141
        %v1144 = vunpack.c.l.s4 1983009808
        %v1145 = vunpack.c.0.s8 %v1144
        %v1146 = vlaneseq
        %v1147 = vshrl.u32 %v1146, 7
        %v1148 = vsub.s32 %v1145, %v1147
        %v1149 = vrot.slane %v1135, %v1148
        %v1150 = vcombine.low %v1126, %v1142
        %v1151 = vcombine.high %v1126, %v1142
        %v1153 = vunpack.c.l.s4 1934713408
        %v1154 = vunpack.c.0.s8 %v1153
        %v1155 = vlaneseq
        %v1156 = vshrl.u32 %v1155, 7
        %v1157 = vsub.s32 %v1154, %v1156
        %v1158 = vrot.slane %v1150, %v1157
        %v1160 = vunpack.c.l.s4 1934713408
        %v1161 = vunpack.c.0.s8 %v1160
        %v1162 = vlaneseq
        %v1163 = vshrl.u32 %v1162, 7
        %v1164 = vsub.s32 %v1161, %v1163
        %v1165 = vrot.slane %v1151, %v1164
        %v1166 = vcombine.low %v1133, %v1149
        %v1167 = vcombine.high %v1133, %v1149
        %v1169 = vunpack.c.l.s4 1934713408
        %v1170 = vunpack.c.0.s8 %v1169
        %v1171 = vlaneseq
        %v1172 = vshrl.u32 %v1171, 7
        %v1173 = vsub.s32 %v1170, %v1172
        %v1174 = vrot.slane %v1166, %v1173
        %v1176 = vunpack.c.l.s4 1934713408
        %v1177 = vunpack.c.0.s8 %v1176
        %v1178 = vlaneseq
        %v1179 = vshrl.u32 %v1178, 7
        %v1180 = vsub.s32 %v1177, %v1179
        %v1181 = vrot.slane %v1167, %v1180
        %v1182 = vcombine.high %v1158, 0.0
        %v1183 = vcombine.high %v1165, 0.0
        %v1184 = vcombine.high %v1174, 0.0
        %v1185 = vcombine.high %v1181, 0.0
        %1188 = vrot.lane.b32.xlu0 %v907, 16
        %v1189 = vpop.permute.xlu0 %1188
        %1190 = vrot.lane.b32.xlu0 %v978, 16
        %v1191 = vpop.permute.xlu0 %1190
        %1196 = vrot.lane.b32.xlu0 %v908, 32
        %v1197 = vpop.permute.xlu0 %1196
        %1198 = vrot.lane.b32.xlu0 %v961, 32
        %v1199 = vpop.permute.xlu0 %1198
        %1204 = vrot.lane.b32.xlu0 %v909, 48
        %v1205 = vpop.permute.xlu0 %1204
        %1206 = vrot.lane.b32.xlu0 %v979, 48
        %v1207 = vpop.permute.xlu0 %1206
        %1212 = vrot.lane.b32.xlu0 %v910, 64
        %v1213 = vpop.permute.xlu0 %1212
        %1214 = vrot.lane.b32.xlu0 %v970, 64
        %v1215 = vpop.permute.xlu0 %1214
        %1220 = vrot.lane.b32.xlu0 %v911, 80
        %v1221 = vpop.permute.xlu0 %1220
        %1222 = vrot.lane.b32.xlu0 %v980, 80
        %v1223 = vpop.permute.xlu0 %1222
        %1228 = vrot.lane.b32.xlu0 %v912, 96
        %v1229 = vpop.permute.xlu0 %1228
        %1230 = vrot.lane.b32.xlu0 %v977, 96
        %v1231 = vpop.permute.xlu0 %1230
        %1236 = vrot.lane.b32.xlu0 %v913, 112
        %v1237 = vpop.permute.xlu0 %1236
        %1238 = vrot.lane.b32.xlu0 %v981, 112
        %v1239 = vpop.permute.xlu0 %1238
        %1244 = vrot.lane.b32.xlu0 %v1111, 16
        %v1245 = vpop.permute.xlu0 %1244
        %1246 = vrot.lane.b32.xlu0 %v1182, 16
        %v1247 = vpop.permute.xlu0 %1246
        %1252 = vrot.lane.b32.xlu0 %v1112, 32
        %v1253 = vpop.permute.xlu0 %1252
        %1254 = vrot.lane.b32.xlu0 %v1165, 32
        %v1255 = vpop.permute.xlu0 %1254
        %1260 = vrot.lane.b32.xlu0 %v1113, 48
        %v1261 = vpop.permute.xlu0 %1260
        %1262 = vrot.lane.b32.xlu0 %v1183, 48
        %v1263 = vpop.permute.xlu0 %1262
        %1268 = vrot.lane.b32.xlu0 %v1114, 64
        %v1269 = vpop.permute.xlu0 %1268
        %1270 = vrot.lane.b32.xlu0 %v1174, 64
        %v1271 = vpop.permute.xlu0 %1270
        %1276 = vrot.lane.b32.xlu0 %v1115, 80
        %v1277 = vpop.permute.xlu0 %1276
        %1278 = vrot.lane.b32.xlu0 %v1184, 80
        %v1279 = vpop.permute.xlu0 %1278
        %1284 = vrot.lane.b32.xlu0 %v1116, 96
        %v1285 = vpop.permute.xlu0 %1284
        %1286 = vrot.lane.b32.xlu0 %v1181, 96
        %v1287 = vpop.permute.xlu0 %1286
        %1292 = vrot.lane.b32.xlu0 %v1117, 112
        %v1293 = vpop.permute.xlu0 %1292
        %1294 = vrot.lane.b32.xlu0 %v1185, 112
        %v1295 = vpop.permute.xlu0 %1294
        %vm1298 = vcmask 130048
        %v1299 = vsel %vm1298, %v906, %v1189
        %v1300 = vsel %vm1298, %v954, %v1191
        %vm1301 = vcmask 261120
        %v1302 = vsel %vm1301, %v1299, %v1197
        %v1303 = vsel %vm1301, %v1300, %v1199
        %vm1304 = vcmask 392192
        %v1305 = vsel %vm1304, %v1302, %v1205
        %v1306 = vsel %vm1304, %v1303, %v1207
        %vm1307 = vcmask 523264
        %v1308 = vsel %vm1307, %v1305, %v1213
        %v1309 = vsel %vm1307, %v1306, %v1215
        %vm1310 = vcmask 654336
        %v1311 = vsel %vm1310, %v1308, %v1221
        %v1312 = vsel %vm1310, %v1309, %v1223
        %vm1313 = vcmask 785408
        %v1314 = vsel %vm1313, %v1311, %v1229
        %v1315 = vsel %vm1313, %v1312, %v1231
        %vm1316 = vcmask 916480
        %v1317 = vsel %vm1316, %v1314, %v1237
        %v1318 = vsel %vm1316, %v1315, %v1239
        %v1319 = vsel %vm1298, %v1110, %v1245
        %v1320 = vsel %vm1298, %v1158, %v1247
        %v1321 = vsel %vm1301, %v1319, %v1253
        %v1322 = vsel %vm1301, %v1320, %v1255
        %v1323 = vsel %vm1304, %v1321, %v1261
        %v1324 = vsel %vm1304, %v1322, %v1263
        %v1325 = vsel %vm1307, %v1323, %v1269
        %v1326 = vsel %vm1307, %v1324, %v1271
        %v1327 = vsel %vm1310, %v1325, %v1277
        %v1328 = vsel %vm1310, %v1326, %v1279
        %v1329 = vsel %vm1313, %v1327, %v1285
        %v1330 = vsel %vm1313, %v1328, %v1287
        %v1331 = vsel %vm1316, %v1329, %v1293
        %v1332 = vsel %vm1316, %v1330, %v1295
        %1333 = vmatprep.subr.mxu0 %v1331
        %1334 = vmatpush1.xpose.msra.mxu0 %v1317
        %1335 = vmatprep.subr.mxu0 %v1332
        %1336 = vmatpush1.xpose.msra.mxu0 %v1318
        %1337 = vmatprep.subr.mxu0 0.0
        %1338 = vmatpush1.xpose.msra.mxu0 0.0
        %1339 = vmatprep.subr.mxu0 0.0
        %1340 = vmatpush1.xpose.msra.mxu0 0.0
        %1341 = vmatprep.subr.mxu0 0.0
        %1342 = vmatpush1.xpose.msra.mxu0 0.0
        %1343 = vmatprep.subr.mxu0 0.0
        %1344 = vmatpush1.xpose.msra.mxu0 0.0
        %1345 = vmatprep.subr.mxu0 0.0
        %1346 = vmatpush1.xpose.msra.mxu0 0.0
        %1347 = vmatprep.subr.mxu0 0.0
        %1348 = vmatpush1.xpose.msra.mxu0 0.0
        %1349 = vmatprep.subr.mxu0 0.0
        %1350 = vmatpush1.xpose.msra.mxu0 0.0
        %1351 = vmatprep.subr.mxu0 0.0
        %1352 = vmatpush1.xpose.msra.mxu0 0.0
        %1353 = vmatprep.subr.mxu0 0.0
        %1354 = vmatpush1.xpose.msra.mxu0 0.0
        %1355 = vmatprep.subr.mxu0 0.0
        %1356 = vmatpush1.xpose.msra.mxu0 0.0
        %1357 = vmatprep.subr.mxu0 0.0
        %1358 = vmatpush1.xpose.msra.mxu0 0.0
        %1359 = vmatprep.subr.mxu0 0.0
        %1360 = vmatpush1.xpose.msra.mxu0 0.0
        %1361 = vmatprep.subr.mxu0 0.0
        %1362 = vmatpush1.xpose.msra.mxu0 0.0
        %1363 = vmatprep.subr.mxu0 0.0
        %1364 = vmatpush1.xpose.msra.mxu0 0.0
        %1365 = vmatprep.subr.mxu0 0.0
        %1366 = vmatpush1.xpose.msra.mxu0 0.0
        %1367 = vmatprep.subr.mxu0 0.0
        %1368 = vmatpush1.xpose.msra.mxu0 0.0
        %1369 = vmatprep.subr.mxu0 0.0
        %1370 = vmatpush1.xpose.msra.mxu0 0.0
        %1371 = vmatprep.subr.mxu0 0.0
        %1372 = vmatpush1.xpose.msra.mxu0 0.0
        %1373 = vmatprep.subr.mxu0 0.0
        %1374 = vmatpush1.xpose.msra.mxu0 0.0
        %1375 = vmatprep.subr.mxu0 0.0
        %1376 = vmatpush1.xpose.msra.mxu0 0.0
        %1377 = vmatprep.subr.mxu0 0.0
        %1378 = vmatpush1.xpose.msra.mxu0 0.0
        %1379 = vmatprep.subr.mxu0 0.0
        %1380 = vmatpush1.xpose.msra.mxu0 0.0
        %1381 = vmatprep.subr.mxu0 0.0
        %1382 = vmatpush1.xpose.msra.mxu0 0.0
        %1383 = vmatprep.subr.mxu0 0.0
        %1384 = vmatpush1.xpose.msra.mxu0 0.0
        %1385 = vmatprep.subr.mxu0 0.0
        %1386 = vmatpush1.xpose.msra.mxu0 0.0
        %1387 = vmatprep.subr.mxu0 0.0
        %1388 = vmatpush1.xpose.msra.mxu0 0.0
        %1389 = vmatprep.subr.mxu0 0.0
        %1390 = vmatpush1.xpose.msra.mxu0 0.0
        %1391 = vmatprep.subr.mxu0 0.0
        %1392 = vmatpush1.xpose.msra.mxu0 0.0
        %1393 = vmatprep.subr.mxu0 0.0
        %1394 = vmatpush1.xpose.msra.mxu0 0.0
        %1395 = vmatprep.subr.mxu0 0.0
        %1396 = vmatpush1.xpose.msra.mxu0 0.0
        %1397 = vmatprep.mubr.f32.mxu0 %v1331
        %1398 = vmatmul.mubr.f32.gmra.mrb[0].mxu0 %v1317
        %v1399 = vpop.f32.mrb[0].mxu0
        %v1400 = vadd.f32 0.0, %v1399
        %v1401 = vpop.f32.mrb[0].mxu0
        %1402 = vmatprep.mubr.f32.mxu0 %v1332
        %1403 = vmatmul.mubr.f32.gmra.mrb[0].mxu0 %v1318
        %v1404 = vpop.f32.mrb[0].mxu0
        %v1405 = vadd.f32 0.0, %v1404
        %v1406 = vpop.f32.mrb[0].mxu0
        %1407 = vdwg.mxu0
        %vm1408 = vcmask 97280
        %1409 = vst.msk [vmem:[%s471] sm:$0xff] %vm1408, %v1400
        %vm1410 = vcmask 93184
        %1411 = vst.msk [vmem:[%s471 + $0x8] sm:$0xf] %vm1410, %v1405
        %p1412 = scmp.lt.s32.totalorder %s26, 1
        %s1413 = scalar_select %p1412, %s26, 1
        %p1414 = scmp.lt.s32.totalorder %s27, 0
        %s1415 = scalar_select %p1414, %s27, 0
        %s1416 = smul.addr %s1415, 2
        %s1417 = smul.addr %s1413, 2
        %s1418 = sadd.s32 %s1416, %s1417
        %s1419 = smul.addr %s1418, 8
        %s1420 = scalar_lea.vmem %s5, %s1419
        // Predicated region
        $region49: #{estimate_light.1} parent=39 // pred_check
          %p1421 = pneg %p210
        $region50: #{estimate_light.1} parent=39 // pred_check_branch
          %1423 = sbr.rel (%p1421) target = $region52
        $region51: #{estimate_light.1} parent=39 // pred_region
          _
        $region52: #{estimate_light.1} parent=39 // pred_fallthru
          _
      $region40: #{estimate_light.1} parent=5 // pred_fallthru
        _
      %p1424 = scmp.le.s32.totalorder 2, %s17
      // Predicated region
      $region53: #{estimate_light.1} parent=5 // pred_check
        %p1425 = pneg %p1424
      $region54: #{estimate_light.1} parent=5 // pred_check_branch
        %1427 = sbr.rel (%p1425) target = $region56
      $region55: #{estimate_light.1} parent=5 // pred_region
        %s1428 = ssub.s32 %s17, 2
        // Predicated region
        $region57: #{estimate_light.1} parent=55 // pred_check
          %p1429 = pneg %p216
        $region58: #{estimate_light.1} parent=55 // pred_check_branch
          %1431 = sbr.rel (%p1429) target = $region60
        $region59: #{estimate_light.1} parent=55 // pred_region
          %p1432 = scmp.lt.s32.totalorder %s28, 1
          %s1433 = scalar_select %p1432, %s28, 1
          %p1434 = scmp.lt.s32.totalorder %s29, 0
          %s1435 = scalar_select %p1434, %s29, 0
          %s1436 = smul.addr %s1435, 2
          %s1437 = smul.addr %s1433, 2
          %s1438 = sadd.s32 %s1436, %s1437
          %s1439 = smul.addr %s1438, 8
          %s1440 = scalar_lea.vmem %s5, %s1439
        $region60: #{estimate_light.1} parent=55 // pred_fallthru
          _
      $region56: #{estimate_light.1} parent=5 // pred_fallthru
        _
    $region6: #{estimate_light.1} parent=1 // loop_footer
      %s21 = sadd.s32 1, %s17
    $region7: #{estimate_light.1} parent=1 // loop_footer_branch
      %16 = sbr.rel target = $region3
    $region8: #{estimate_light.1} parent=1 // loop_exit
      _
    %1441 = vsyncpa [#allocation3], 1
    %s1442 = scalar_lea.sflag [#allocation3], 1
    %1443 = vsyncpa %s1442, 1
    %1444 = vsyncpa [#allocation5], 1
    %s1445 = scalar_lea.sflag [#allocation5], 1
    %1446 = vsyncpa %s1445, 1

</llo_original>
